<compile_context>
chip_gen: v7x
topology: tpu7x:2x2x1
jax: 0.10.0
libtpu: 0.0.40
codegen_flags: <defaults>
</compile_context>

<pallas_src>
import functools

import jax
import jax.numpy as jnp
from jax.experimental import pallas as pl
from jax.experimental.pallas import tpu as pltpu

_MAX_UNROLL_CHUNKS = 64   # fully unroll 128-lane chunk loops up to this length


# ---------------------------------------------------------------------------
# Shared in-kernel pieces
# ---------------------------------------------------------------------------
def _gate_mlp_to_ref(y, w1t, b1, w2, b2, n_batches, C, dst_ref):
    """sigmoid(fc2(relu(fc1(y)))) with channels on sublanes, written
    lane-replicated into dst_ref ((n_batches*C, L)).

    y: (n_batches*C, 1) f32.  ~1k FLOPs -> VPU/XLU, no MXU push, no transpose.
    """
    L = dst_ref.shape[-1]
    for b in range(n_batches):                                   # tiny, unrolled
        y_b = y[b * C:(b + 1) * C, :]                            # (C, 1)
        # fc1: h[j] = sum_c W1[j, c] * y[c] + b1[j]  (VPU mul + sublane reduce)
        h = jnp.sum(w1t * y_b, axis=0, keepdims=True) + b1       # (1, Hd)
        h = jnp.maximum(h, 0.0)
        # fc2: s[c] = sum_j W2[c, j] * h[j] + b2[c]  (VPU mul + lane reduce)
        s = jnp.sum(w2 * h, axis=1, keepdims=True) + b2          # (C, 1)
        dst_ref[b * C:(b + 1) * C, :] = jnp.broadcast_to(
            jax.nn.sigmoid(s), (C, L))


# ---------------------------------------------------------------------------
# Fused single-pass kernel (x resident in VMEM)
# ---------------------------------------------------------------------------
def _fused_kernel(x_ref, w1t_ref, b1_ref, w2_ref, b2_ref, o_ref, gate_scr,
                  *, n_batches, C, S, inv_s):
    rows = n_batches * C
    n_full = S // 128
    rem = S - n_full * 128

    # ---- spatial sum: VPU chunk adds; single cross-lane (XLU) reduce at end --
    partial = jnp.zeros((rows, 128), jnp.float32)
    if n_full > 0:
        if n_full <= _MAX_UNROLL_CHUNKS:
            for j in range(n_full):
                partial = partial + x_ref[:, j * 128:(j + 1) * 128].astype(
                    jnp.float32)
        else:
            def body(j, acc):
                col = pl.multiple_of(j * 128, 128)
                return acc + x_ref[:, pl.ds(col, 128)].astype(jnp.float32)
            partial = jax.lax.fori_loop(0, n_full, body, partial, unroll=8)
    total = jnp.sum(partial, axis=-1, keepdims=True)                  # (rows, 1)
    if rem:
        total = total + jnp.sum(x_ref[:, n_full * 128:S].astype(jnp.float32),
                                axis=-1, keepdims=True)

    # ---- tiny gate MLP -> lane-replicated (rows, 128) gate in VMEM scratch ---
    _gate_mlp_to_ref(total * inv_s, w1t_ref[...], b1_ref[...], w2_ref[...],
                     b2_ref[...], n_batches, C, gate_scr)
    g = gate_scr[...]                                                 # (rows,128)

    # ---- scale + writeback: one VPU mul per 128-lane chunk, gate vreg reused -
    if n_full > 0:
        if n_full <= _MAX_UNROLL_CHUNKS:
            for j in range(n_full):
                sl = slice(j * 128, (j + 1) * 128)
                o_ref[:, sl] = (x_ref[:, sl] * g).astype(o_ref.dtype)
        else:
            @pl.loop(0, n_full)
            def _(j):
                col = pl.multiple_of(j * 128, 128)
                o_ref[:, pl.ds(col, 128)] = (
                    x_ref[:, pl.ds(col, 128)] * g).astype(o_ref.dtype)
    if rem:
        o_ref[:, n_full * 128:S] = (
            x_ref[:, n_full * 128:S] * gate_scr[:, 0:1]).astype(o_ref.dtype)


# ---------------------------------------------------------------------------
# Streaming two-pass kernels
# ---------------------------------------------------------------------------
def _gate_kernel(x_ref, w1t_ref, b1_ref, w2_ref, b2_ref, gate_ref, acc_ref,
                 *, local_B, C, TS, S, inv_s):
    """Phase 1: spatial-sum reduction (VPU accumulation into a (rows, 128)
    scratch) + tiny MLP gate, finalized on the last spatial tile."""
    k = pl.program_id(1)

    @pl.when(k == 0)
    def _init():
        acc_ref[...] = jnp.zeros_like(acc_ref)

    rows = acc_ref.shape[0]
    n_chunks = TS // 128
    if S % TS == 0:
        partial = x_ref[:, 0:128].astype(jnp.float32)
        for j in range(1, n_chunks):
            partial = partial + x_ref[:, j * 128:(j + 1) * 128].astype(jnp.float32)
    else:
        # Last tile is padded by Pallas: mask out-of-range lanes before adding.
        lane = jax.lax.broadcasted_iota(jnp.int32, (rows, 128), 1)
        col0 = k * TS
        partial = jnp.zeros((rows, 128), jnp.float32)
        for j in range(n_chunks):
            chunk = x_ref[:, j * 128:(j + 1) * 128].astype(jnp.float32)
            valid = (lane + (col0 + j * 128)) < S
            partial = partial + jnp.where(valid, chunk, 0.0)
    acc_ref[...] += partial

    @pl.when(k == pl.num_programs(1) - 1)
    def _finalize():
        # Only cross-lane (XLU) reduce of the whole pass + the tiny gate MLP.
        y = jnp.sum(acc_ref[...], axis=-1, keepdims=True) * inv_s     # (rows, 1)
        _gate_mlp_to_ref(y, w1t_ref[...], b1_ref[...], w2_ref[...],
                         b2_ref[...], local_B, C, gate_ref)


def _scale_kernel(gate_ref, x_ref, o_ref, *, TS):
    """Phase 2: stream spatial tiles of x, multiply each 128-lane chunk by the
    resident lane-replicated gate vreg (pure VPU; no per-tile lane broadcast).
    Writes to padded tail columns of the last tile are dropped by Pallas."""
    g = gate_ref[...]                                  # (rows, 128), fetched once
    for j in range(TS // 128):
        sl = slice(j * 128, (j + 1) * 128)
        o_ref[:, sl] = (x_ref[:, sl] * g).astype(o_ref.dtype)


# ---------------------------------------------------------------------------
# Tiling / dispatch helpers
# ---------------------------------------------------------------------------
def _scoped_vmem_bytes():
    """Per-generation VMEM budget: half of physical VMEM, capped at 32 MiB
    (v5e/v6e: 128 MiB physical -> 32 MiB; v7x: 64 MiB physical -> 32 MiB)."""
    phys = 64 << 20
    try:
        cap = getattr(pltpu.get_tpu_info(), "vmem_capacity_bytes", None)
        if cap:
            phys = int(cap)
    except Exception:  # non-TPU tracing / API drift: stay conservative
        pass
    return min(phys // 2, 32 << 20)


def _pick_spatial_tile(S, rows, budget_bytes, buffers):
    """Largest lane-dense spatial tile with `buffers` resident (double-buffered)
    copies under the budget; prefers tiles that divide S (no tail masking)."""
    s_pad = max(128, -(-S // 128) * 128)
    cands = [ts for ts in (4096, 2048, 1024, 512, 256, 128) if ts <= s_pad]
    fitting = [ts for ts in cands if buffers * rows * ts * 4 <= budget_bytes]
    if not fitting:
        # TODO(synk): row-tile phase 2 as well if B*C ever gets this large.
        fitting = [cands[-1]]
    for ts in fitting:
        if S % ts == 0:
            return ts          # exact tiling: no tail masking needed
    return fitting[0]          # largest fitting tile; tail handled by masking


def _phase1_row_blocks(B, C):
    """Split phase-1 rows into (up to) two batch-aligned, sublane-aligned row
    blocks so v7x's two TensorCores can each take half of the reduction."""
    if B % 2 == 0 and ((B // 2) * C) % 8 == 0:
        return 2
    return 1


# ---------------------------------------------------------------------------
# Public wrapper
# ---------------------------------------------------------------------------
def channel_attention(x, w1, b1, w2, b2, *, force_streaming=False,
                      donate_x=False):
    """x: (B, C, D, H, W).  w1: (Hd, C), b1: (Hd,), w2: (C, Hd), b2: (C,)
    (PyTorch nn.Linear layout, with C == in_channels * 2)."""
    B, C, D, H, W = x.shape
    Hd = w1.shape[0]
    S = D * H * W
    BC = B * C
    inv_s = 1.0 / S

    # Free XLA-side layout plumbing (keeps transposes/reshapes out of kernels):
    x2 = x.reshape(BC, S)            # channels on sublanes, spatial on lanes
    w1t = w1.T                       # (C, Hd)
    b1r = b1.reshape(1, Hd)
    b2c = b2.reshape(C, 1)

    scoped = _scoped_vmem_bytes()
    x_bytes = BC * S * x2.dtype.itemsize
    weight_bytes = 2 * (2 * C * Hd + Hd + C) * 4

    # ---------------- Fused single-pass fast path ----------------
    # 4x covers (possibly) double-buffered input + output blocks; 1 MiB margin.
    if not force_streaming and 4 * x_bytes + weight_bytes + (1 << 20) <= scoped:
        out2 = pl.pallas_call(
            functools.partial(_fused_kernel, n_batches=B, C=C, S=S, inv_s=inv_s),
            out_shape=jax.ShapeDtypeStruct((BC, S), x2.dtype),
            grid=(1,),
            in_specs=[
                pl.BlockSpec((BC, S), lambda i: (0, 0)),
                pl.BlockSpec((C, Hd), lambda i: (0, 0)),
                pl.BlockSpec((1, Hd), lambda i: (0, 0)),
                pl.BlockSpec((C, Hd), lambda i: (0, 0)),
                pl.BlockSpec((C, 1), lambda i: (0, 0)),
            ],
            out_specs=pl.BlockSpec((BC, S), lambda i: (0, 0)),
            scratch_shapes=[pltpu.VMEM((BC, 128), jnp.float32)],
            input_output_aliases=({0: 0} if donate_x else {}),
            compiler_params=pltpu.CompilerParams(vmem_limit_bytes=scoped),
        )(x2, w1t, b1r, w2, b2c)
        return out2.reshape(B, C, D, H, W)

    # ---------------- Streaming two-pass path ----------------
    budget = max(scoped - (2 << 20), 4 << 20)
    ts1 = _pick_spatial_tile(S, BC, budget, buffers=2)  # phase 1: input only
    ts2 = _pick_spatial_tile(S, BC, budget, buffers=4)  # phase 2: in + out
    n_rb = _phase1_row_blocks(B, C)
    rb = BC // n_rb

    # Phase 1: streaming spatial reduction + gate MLP -> lane-replicated gate.
    gate = pl.pallas_call(
        functools.partial(_gate_kernel, local_B=B // n_rb, C=C, TS=ts1, S=S,
                          inv_s=inv_s),
        out_shape=jax.ShapeDtypeStruct((BC, 128), jnp.float32),
        grid=(n_rb, pl.cdiv(S, ts1)),
        in_specs=[
            pl.BlockSpec((rb, ts1), lambda i, k: (i, k)),
            pl.BlockSpec((C, Hd), lambda i, k: (0, 0)),
            pl.BlockSpec((1, Hd), lambda i, k: (0, 0)),
            pl.BlockSpec((C, Hd), lambda i, k: (0, 0)),
            pl.BlockSpec((C, 1), lambda i, k: (0, 0)),
        ],
        out_specs=pl.BlockSpec((rb, 128), lambda i, k: (i, 0)),
        scratch_shapes=[pltpu.VMEM((rb, 128), jnp.float32)],
        compiler_params=pltpu.CompilerParams(
            dimension_semantics=("parallel", "arbitrary"),
            vmem_limit_bytes=scoped),
    )(x2, w1t, b1r, w2, b2c)

    # Phase 2: stream x tiles and apply the resident gate.
    out2 = pl.pallas_call(
        functools.partial(_scale_kernel, TS=ts2),
        out_shape=jax.ShapeDtypeStruct((BC, S), x2.dtype),
        grid=(pl.cdiv(S, ts2),),
        in_specs=[
            pl.BlockSpec((BC, 128), lambda k: (0, 0)),
            pl.BlockSpec((BC, ts2), lambda k: (0, k)),
        ],
        out_specs=pl.BlockSpec((BC, ts2), lambda k: (0, k)),
        input_output_aliases=({1: 0} if donate_x else {}),
        compiler_params=pltpu.CompilerParams(
            dimension_semantics=("parallel",),
            vmem_limit_bytes=scoped),
    )(gate, x2)

    return out2.reshape(B, C, D, H, W)


def channel_attention_ref(x, w1, b1, w2, b2):
    B, C = x.shape[0], x.shape[1]
    y = jnp.mean(x.reshape(B, C, -1), axis=-1)
    h = jnp.maximum(y @ w1.T + b1, 0.0)
    s = jax.nn.sigmoid(h @ w2.T + b2)
    return x * s.reshape(B, C, 1, 1, 1)


if __name__ == "__main__":
    # Module config: in_channels=16, reduction_ratio=4
    #   -> forward requires num_channels == in_channels * 2 == 32
    #   -> fc1: 32 -> 8, fc2: 8 -> 32
    in_channels = 16
    reduction_ratio = 4
    C = in_channels * 2              # 32
    Hd = C // reduction_ratio        # 8
    B, D, H, W = 2, 16, 16, 16       # S = 4096

    key = jax.random.PRNGKey(0)
    kx, kw1, kb1, kw2, kb2 = jax.random.split(key, 5)

    x = jax.random.normal(kx, (B, C, D, H, W), dtype=jnp.float32)

    # nn.Linear default init: uniform(-1/sqrt(fan_in), +1/sqrt(fan_in)).
    bound1 = 1.0 / (C ** 0.5)
    w1 = jax.random.uniform(kw1, (Hd, C), jnp.float32, -bound1, bound1)
    b1 = jax.random.uniform(kb1, (Hd,), jnp.float32, -bound1, bound1)
    bound2 = 1.0 / (Hd ** 0.5)
    w2 = jax.random.uniform(kw2, (C, Hd), jnp.float32, -bound2, bound2)
    b2 = jax.random.uniform(kb2, (C,), jnp.float32, -bound2, bound2)

    ref = channel_attention_ref(x, w1, b1, w2, b2)

    # Fused single-pass path (x fits in VMEM at this shape).
    out_fused = jax.block_until_ready(channel_attention(x, w1, b1, w2, b2))
    assert out_fused.shape == x.shape
    assert jnp.allclose(out_fused, ref, atol=1e-5, rtol=1e-5), "fused mismatch"

    # Streaming two-pass path (forced), exercising the large-x code path.
    out_stream = jax.block_until_ready(
        channel_attention(x, w1, b1, w2, b2, force_streaming=True))
    assert jnp.allclose(out_stream, ref, atol=1e-5, rtol=1e-5), "stream mismatch"

    print("KERNEL_OK")
</pallas_src>

<mosaic_0001>
module attributes {stable_mosaic.version = 11 : i64} {
  func.func @_fused_kernel(%arg0: i32, %arg1: memref<64x4096xf32, #tpu.memory_space<vmem>>, %arg2: memref<32x8xf32, #tpu.memory_space<vmem>>, %arg3: memref<1x8xf32, #tpu.memory_space<vmem>>, %arg4: memref<32x8xf32, #tpu.memory_space<vmem>>, %arg5: memref<32x1xf32, #tpu.memory_space<vmem>>, %arg6: memref<64x4096xf32, #tpu.memory_space<vmem>>, %arg7: memref<64x128xf32, #tpu.memory_space<vmem>>) attributes {dimension_semantics = [#tpu.dimension_semantics<arbitrary>], iteration_bounds = array<i64: 1>, scalar_prefetch = 0 : i64, scratch_operands = 1 : i64, tpu.core_type = #tpu.core_type<tc>, window_params = [{pipeline_mode = #tpu.pipeline_mode<synchronous>, transform_indices = @transform_0, window_bounds = array<i64: 64, 4096>}, {pipeline_mode = #tpu.pipeline_mode<synchronous>, transform_indices = @transform_1, window_bounds = array<i64: 32, 8>}, {pipeline_mode = #tpu.pipeline_mode<synchronous>, transform_indices = @transform_2, window_bounds = array<i64: 1, 8>}, {pipeline_mode = #tpu.pipeline_mode<synchronous>, transform_indices = @transform_3, window_bounds = array<i64: 32, 8>}, {pipeline_mode = #tpu.pipeline_mode<synchronous>, transform_indices = @transform_4, window_bounds = array<i64: 32, 1>}, {pipeline_mode = #tpu.pipeline_mode<synchronous>, transform_indices = @transform_5, window_bounds = array<i64: 64, 4096>}]} {
    %cst = arith.constant 0.000000e+00 : f32
    %0 = vector.broadcast %cst : f32 to vector<64x128xf32>
    %c0 = arith.constant 0 : index
    %c0_0 = arith.constant 0 : index
    %1 = vector.load %arg1[%c0, %c0_0] : memref<64x4096xf32, #tpu.memory_space<vmem>>, vector<64x128xf32>
    %2 = arith.addf %0, %1 : vector<64x128xf32>
    %c0_1 = arith.constant 0 : index
    %c128 = arith.constant 128 : index
    %3 = vector.load %arg1[%c0_1, %c128] : memref<64x4096xf32, #tpu.memory_space<vmem>>, vector<64x128xf32>
    %4 = arith.addf %2, %3 : vector<64x128xf32>
    %c0_2 = arith.constant 0 : index
    %c256 = arith.constant 256 : index
    %5 = vector.load %arg1[%c0_2, %c256] : memref<64x4096xf32, #tpu.memory_space<vmem>>, vector<64x128xf32>
    %6 = arith.addf %4, %5 : vector<64x128xf32>
    %c0_3 = arith.constant 0 : index
    %c384 = arith.constant 384 : index
    %7 = vector.load %arg1[%c0_3, %c384] : memref<64x4096xf32, #tpu.memory_space<vmem>>, vector<64x128xf32>
    %8 = arith.addf %6, %7 : vector<64x128xf32>
    %c0_4 = arith.constant 0 : index
    %c512 = arith.constant 512 : index
    %9 = vector.load %arg1[%c0_4, %c512] : memref<64x4096xf32, #tpu.memory_space<vmem>>, vector<64x128xf32>
    %10 = arith.addf %8, %9 : vector<64x128xf32>
    %c0_5 = arith.constant 0 : index
    %c640 = arith.constant 640 : index
    %11 = vector.load %arg1[%c0_5, %c640] : memref<64x4096xf32, #tpu.memory_space<vmem>>, vector<64x128xf32>
    %12 = arith.addf %10, %11 : vector<64x128xf32>
    %c0_6 = arith.constant 0 : index
    %c768 = arith.constant 768 : index
    %13 = vector.load %arg1[%c0_6, %c768] : memref<64x4096xf32, #tpu.memory_space<vmem>>, vector<64x128xf32>
    %14 = arith.addf %12, %13 : vector<64x128xf32>
    %c0_7 = arith.constant 0 : index
    %c896 = arith.constant 896 : index
    %15 = vector.load %arg1[%c0_7, %c896] : memref<64x4096xf32, #tpu.memory_space<vmem>>, vector<64x128xf32>
    %16 = arith.addf %14, %15 : vector<64x128xf32>
    %c0_8 = arith.constant 0 : index
    %c1024 = arith.constant 1024 : index
    %17 = vector.load %arg1[%c0_8, %c1024] : memref<64x4096xf32, #tpu.memory_space<vmem>>, vector<64x128xf32>
    %18 = arith.addf %16, %17 : vector<64x128xf32>
    %c0_9 = arith.constant 0 : index
    %c1152 = arith.constant 1152 : index
    %19 = vector.load %arg1[%c0_9, %c1152] : memref<64x4096xf32, #tpu.memory_space<vmem>>, vector<64x128xf32>
    %20 = arith.addf %18, %19 : vector<64x128xf32>
    %c0_10 = arith.constant 0 : index
    %c1280 = arith.constant 1280 : index
    %21 = vector.load %arg1[%c0_10, %c1280] : memref<64x4096xf32, #tpu.memory_space<vmem>>, vector<64x128xf32>
    %22 = arith.addf %20, %21 : vector<64x128xf32>
    %c0_11 = arith.constant 0 : index
    %c1408 = arith.constant 1408 : index
    %23 = vector.load %arg1[%c0_11, %c1408] : memref<64x4096xf32, #tpu.memory_space<vmem>>, vector<64x128xf32>
    %24 = arith.addf %22, %23 : vector<64x128xf32>
    %c0_12 = arith.constant 0 : index
    %c1536 = arith.constant 1536 : index
    %25 = vector.load %arg1[%c0_12, %c1536] : memref<64x4096xf32, #tpu.memory_space<vmem>>, vector<64x128xf32>
    %26 = arith.addf %24, %25 : vector<64x128xf32>
    %c0_13 = arith.constant 0 : index
    %c1664 = arith.constant 1664 : index
    %27 = vector.load %arg1[%c0_13, %c1664] : memref<64x4096xf32, #tpu.memory_space<vmem>>, vector<64x128xf32>
    %28 = arith.addf %26, %27 : vector<64x128xf32>
    %c0_14 = arith.constant 0 : index
    %c1792 = arith.constant 1792 : index
    %29 = vector.load %arg1[%c0_14, %c1792] : memref<64x4096xf32, #tpu.memory_space<vmem>>, vector<64x128xf32>
    %30 = arith.addf %28, %29 : vector<64x128xf32>
    %c0_15 = arith.constant 0 : index
    %c1920 = arith.constant 1920 : index
    %31 = vector.load %arg1[%c0_15, %c1920] : memref<64x4096xf32, #tpu.memory_space<vmem>>, vector<64x128xf32>
    %32 = arith.addf %30, %31 : vector<64x128xf32>
    %c0_16 = arith.constant 0 : index
    %c2048 = arith.constant 2048 : index
    %33 = vector.load %arg1[%c0_16, %c2048] : memref<64x4096xf32, #tpu.memory_space<vmem>>, vector<64x128xf32>
    %34 = arith.addf %32, %33 : vector<64x128xf32>
    %c0_17 = arith.constant 0 : index
    %c2176 = arith.constant 2176 : index
    %35 = vector.load %arg1[%c0_17, %c2176] : memref<64x4096xf32, #tpu.memory_space<vmem>>, vector<64x128xf32>
    %36 = arith.addf %34, %35 : vector<64x128xf32>
    %c0_18 = arith.constant 0 : index
    %c2304 = arith.constant 2304 : index
    %37 = vector.load %arg1[%c0_18, %c2304] : memref<64x4096xf32, #tpu.memory_space<vmem>>, vector<64x128xf32>
    %38 = arith.addf %36, %37 : vector<64x128xf32>
    %c0_19 = arith.constant 0 : index
    %c2432 = arith.constant 2432 : index
    %39 = vector.load %arg1[%c0_19, %c2432] : memref<64x4096xf32, #tpu.memory_space<vmem>>, vector<64x128xf32>
    %40 = arith.addf %38, %39 : vector<64x128xf32>
    %c0_20 = arith.constant 0 : index
    %c2560 = arith.constant 2560 : index
    %41 = vector.load %arg1[%c0_20, %c2560] : memref<64x4096xf32, #tpu.memory_space<vmem>>, vector<64x128xf32>
    %42 = arith.addf %40, %41 : vector<64x128xf32>
    %c0_21 = arith.constant 0 : index
    %c2688 = arith.constant 2688 : index
    %43 = vector.load %arg1[%c0_21, %c2688] : memref<64x4096xf32, #tpu.memory_space<vmem>>, vector<64x128xf32>
    %44 = arith.addf %42, %43 : vector<64x128xf32>
    %c0_22 = arith.constant 0 : index
    %c2816 = arith.constant 2816 : index
    %45 = vector.load %arg1[%c0_22, %c2816] : memref<64x4096xf32, #tpu.memory_space<vmem>>, vector<64x128xf32>
    %46 = arith.addf %44, %45 : vector<64x128xf32>
    %c0_23 = arith.constant 0 : index
    %c2944 = arith.constant 2944 : index
    %47 = vector.load %arg1[%c0_23, %c2944] : memref<64x4096xf32, #tpu.memory_space<vmem>>, vector<64x128xf32>
    %48 = arith.addf %46, %47 : vector<64x128xf32>
    %c0_24 = arith.constant 0 : index
    %c3072 = arith.constant 3072 : index
    %49 = vector.load %arg1[%c0_24, %c3072] : memref<64x4096xf32, #tpu.memory_space<vmem>>, vector<64x128xf32>
    %50 = arith.addf %48, %49 : vector<64x128xf32>
    %c0_25 = arith.constant 0 : index
    %c3200 = arith.constant 3200 : index
    %51 = vector.load %arg1[%c0_25, %c3200] : memref<64x4096xf32, #tpu.memory_space<vmem>>, vector<64x128xf32>
    %52 = arith.addf %50, %51 : vector<64x128xf32>
    %c0_26 = arith.constant 0 : index
    %c3328 = arith.constant 3328 : index
    %53 = vector.load %arg1[%c0_26, %c3328] : memref<64x4096xf32, #tpu.memory_space<vmem>>, vector<64x128xf32>
    %54 = arith.addf %52, %53 : vector<64x128xf32>
    %c0_27 = arith.constant 0 : index
    %c3456 = arith.constant 3456 : index
    %55 = vector.load %arg1[%c0_27, %c3456] : memref<64x4096xf32, #tpu.memory_space<vmem>>, vector<64x128xf32>
    %56 = arith.addf %54, %55 : vector<64x128xf32>
    %c0_28 = arith.constant 0 : index
    %c3584 = arith.constant 3584 : index
    %57 = vector.load %arg1[%c0_28, %c3584] : memref<64x4096xf32, #tpu.memory_space<vmem>>, vector<64x128xf32>
    %58 = arith.addf %56, %57 : vector<64x128xf32>
    %c0_29 = arith.constant 0 : index
    %c3712 = arith.constant 3712 : index
    %59 = vector.load %arg1[%c0_29, %c3712] : memref<64x4096xf32, #tpu.memory_space<vmem>>, vector<64x128xf32>
    %60 = arith.addf %58, %59 : vector<64x128xf32>
    %c0_30 = arith.constant 0 : index
    %c3840 = arith.constant 3840 : index
    %61 = vector.load %arg1[%c0_30, %c3840] : memref<64x4096xf32, #tpu.memory_space<vmem>>, vector<64x128xf32>
    %62 = arith.addf %60, %61 : vector<64x128xf32>
    %c0_31 = arith.constant 0 : index
    %c3968 = arith.constant 3968 : index
    %63 = vector.load %arg1[%c0_31, %c3968] : memref<64x4096xf32, #tpu.memory_space<vmem>>, vector<64x128xf32>
    %64 = arith.addf %62, %63 : vector<64x128xf32>
    %cst_32 = arith.constant dense<0.000000e+00> : vector<64xf32>
    %65 = vector.multi_reduction <add>, %64, %cst_32 [1] : vector<64x128xf32> to vector<64xf32>
    %66 = vector.shape_cast %65 : vector<64xf32> to vector<64x1xf32>
    %cst_33 = arith.constant 2.44140625E-4 : f32
    %67 = vector.broadcast %cst_33 : f32 to vector<64x1xf32>
    %68 = arith.mulf %66, %67 : vector<64x1xf32>
    %c0_34 = arith.constant 0 : index
    %c0_35 = arith.constant 0 : index
    %69 = vector.load %arg2[%c0_34, %c0_35] : memref<32x8xf32, #tpu.memory_space<vmem>>, vector<32x8xf32>
    %c0_36 = arith.constant 0 : index
    %c0_37 = arith.constant 0 : index
    %70 = vector.load %arg3[%c0_36, %c0_37] : memref<1x8xf32, #tpu.memory_space<vmem>>, vector<1x8xf32>
    %c0_38 = arith.constant 0 : index
    %c0_39 = arith.constant 0 : index
    %71 = vector.load %arg4[%c0_38, %c0_39] : memref<32x8xf32, #tpu.memory_space<vmem>>, vector<32x8xf32>
    %c0_40 = arith.constant 0 : index
    %c0_41 = arith.constant 0 : index
    %72 = vector.load %arg5[%c0_40, %c0_41] : memref<32x1xf32, #tpu.memory_space<vmem>>, vector<32x1xf32>
    %73 = vector.extract_strided_slice %68 {offsets = [0, 0], sizes = [32, 1], strides = [1, 1]} : vector<64x1xf32> to vector<32x1xf32>
    %74 = vector.broadcast %73 : vector<32x1xf32> to vector<32x8xf32>
    %75 = arith.mulf %69, %74 : vector<32x8xf32>
    %cst_42 = arith.constant dense<0.000000e+00> : vector<8xf32>
    %76 = vector.multi_reduction <add>, %75, %cst_42 [0] : vector<32x8xf32> to vector<8xf32>
    %77 = vector.shape_cast %76 : vector<8xf32> to vector<1x8xf32>
    %78 = arith.addf %77, %70 : vector<1x8xf32>
    %cst_43 = arith.constant 0.000000e+00 : f32
    %79 = vector.broadcast %cst_43 : f32 to vector<1x8xf32>
    %80 = arith.maximumf %78, %79 : vector<1x8xf32>
    %81 = vector.broadcast %80 : vector<1x8xf32> to vector<32x8xf32>
    %82 = arith.mulf %71, %81 : vector<32x8xf32>
    %cst_44 = arith.constant dense<0.000000e+00> : vector<32xf32>
    %83 = vector.multi_reduction <add>, %82, %cst_44 [1] : vector<32x8xf32> to vector<32xf32>
    %84 = vector.shape_cast %83 : vector<32xf32> to vector<32x1xf32>
    %85 = arith.addf %84, %72 : vector<32x1xf32>
    %86 = arith.negf %85 : vector<32x1xf32>
    %87 = math.exp %86 : vector<32x1xf32>
    %cst_45 = arith.constant 1.000000e+00 : f32
    %88 = vector.broadcast %cst_45 : f32 to vector<32x1xf32>
    %89 = arith.addf %88, %87 : vector<32x1xf32>
    %90 = arith.divf %88, %89 : vector<32x1xf32>
    %91 = vector.shape_cast %90 : vector<32x1xf32> to vector<32x1xf32>
    %92 = vector.broadcast %91 : vector<32x1xf32> to vector<32x128xf32>
    %c0_46 = arith.constant 0 : index
    %c0_47 = arith.constant 0 : index
    %93 = vector.load %arg7[%c0_46, %c0_47] : memref<64x128xf32, #tpu.memory_space<vmem>>, vector<32x128xf32>
    tpu.vector_store %arg7[%c0_46, %c0_47], %92 {strides = array<i32>} : memref<64x128xf32, #tpu.memory_space<vmem>>, vector<32x128xf32>,
    %94 = vector.extract_strided_slice %68 {offsets = [32, 0], sizes = [32, 1], strides = [1, 1]} : vector<64x1xf32> to vector<32x1xf32>
    %95 = vector.broadcast %94 : vector<32x1xf32> to vector<32x8xf32>
    %96 = arith.mulf %69, %95 : vector<32x8xf32>
    %cst_48 = arith.constant dense<0.000000e+00> : vector<8xf32>
    %97 = vector.multi_reduction <add>, %96, %cst_48 [0] : vector<32x8xf32> to vector<8xf32>
    %98 = vector.shape_cast %97 : vector<8xf32> to vector<1x8xf32>
    %99 = arith.addf %98, %70 : vector<1x8xf32>
    %cst_49 = arith.constant 0.000000e+00 : f32
    %100 = vector.broadcast %cst_49 : f32 to vector<1x8xf32>
    %101 = arith.maximumf %99, %100 : vector<1x8xf32>
    %102 = vector.broadcast %101 : vector<1x8xf32> to vector<32x8xf32>
    %103 = arith.mulf %71, %102 : vector<32x8xf32>
    %cst_50 = arith.constant dense<0.000000e+00> : vector<32xf32>
    %104 = vector.multi_reduction <add>, %103, %cst_50 [1] : vector<32x8xf32> to vector<32xf32>
    %105 = vector.shape_cast %104 : vector<32xf32> to vector<32x1xf32>
    %106 = arith.addf %105, %72 : vector<32x1xf32>
    %107 = arith.negf %106 : vector<32x1xf32>
    %108 = math.exp %107 : vector<32x1xf32>
    %cst_51 = arith.constant 1.000000e+00 : f32
    %109 = vector.broadcast %cst_51 : f32 to vector<32x1xf32>
    %110 = arith.addf %109, %108 : vector<32x1xf32>
    %111 = arith.divf %109, %110 : vector<32x1xf32>
    %112 = vector.shape_cast %111 : vector<32x1xf32> to vector<32x1xf32>
    %113 = vector.broadcast %112 : vector<32x1xf32> to vector<32x128xf32>
    %c32 = arith.constant 32 : index
    %c0_52 = arith.constant 0 : index
    %114 = vector.load %arg7[%c32, %c0_52] : memref<64x128xf32, #tpu.memory_space<vmem>>, vector<32x128xf32>
    tpu.vector_store %arg7[%c32, %c0_52], %113 {strides = array<i32>} : memref<64x128xf32, #tpu.memory_space<vmem>>, vector<32x128xf32>,
    %c0_53 = arith.constant 0 : index
    %c0_54 = arith.constant 0 : index
    %115 = vector.load %arg7[%c0_53, %c0_54] : memref<64x128xf32, #tpu.memory_space<vmem>>, vector<64x128xf32>
    %c0_55 = arith.constant 0 : index
    %c0_56 = arith.constant 0 : index
    %116 = vector.load %arg1[%c0_55, %c0_56] : memref<64x4096xf32, #tpu.memory_space<vmem>>, vector<64x128xf32>
    %117 = arith.mulf %116, %115 : vector<64x128xf32>
    %c0_57 = arith.constant 0 : index
    %c0_58 = arith.constant 0 : index
    %118 = vector.load %arg6[%c0_57, %c0_58] : memref<64x4096xf32, #tpu.memory_space<vmem>>, vector<64x128xf32>
    tpu.vector_store %arg6[%c0_57, %c0_58], %117 {strides = array<i32>} : memref<64x4096xf32, #tpu.memory_space<vmem>>, vector<64x128xf32>,
    %c0_59 = arith.constant 0 : index
    %c128_60 = arith.constant 128 : index
    %119 = vector.load %arg1[%c0_59, %c128_60] : memref<64x4096xf32, #tpu.memory_space<vmem>>, vector<64x128xf32>
    %120 = arith.mulf %119, %115 : vector<64x128xf32>
    %c0_61 = arith.constant 0 : index
    %c128_62 = arith.constant 128 : index
    %121 = vector.load %arg6[%c0_61, %c128_62] : memref<64x4096xf32, #tpu.memory_space<vmem>>, vector<64x128xf32>
    tpu.vector_store %arg6[%c0_61, %c128_62], %120 {strides = array<i32>} : memref<64x4096xf32, #tpu.memory_space<vmem>>, vector<64x128xf32>,
    %c0_63 = arith.constant 0 : index
    %c256_64 = arith.constant 256 : index
    %122 = vector.load %arg1[%c0_63, %c256_64] : memref<64x4096xf32, #tpu.memory_space<vmem>>, vector<64x128xf32>
    %123 = arith.mulf %122, %115 : vector<64x128xf32>
    %c0_65 = arith.constant 0 : index
    %c256_66 = arith.constant 256 : index
    %124 = vector.load %arg6[%c0_65, %c256_66] : memref<64x4096xf32, #tpu.memory_space<vmem>>, vector<64x128xf32>
    tpu.vector_store %arg6[%c0_65, %c256_66], %123 {strides = array<i32>} : memref<64x4096xf32, #tpu.memory_space<vmem>>, vector<64x128xf32>,
    %c0_67 = arith.constant 0 : index
    %c384_68 = arith.constant 384 : index
    %125 = vector.load %arg1[%c0_67, %c384_68] : memref<64x4096xf32, #tpu.memory_space<vmem>>, vector<64x128xf32>
    %126 = arith.mulf %125, %115 : vector<64x128xf32>
    %c0_69 = arith.constant 0 : index
    %c384_70 = arith.constant 384 : index
    %127 = vector.load %arg6[%c0_69, %c384_70] : memref<64x4096xf32, #tpu.memory_space<vmem>>, vector<64x128xf32>
    tpu.vector_store %arg6[%c0_69, %c384_70], %126 {strides = array<i32>} : memref<64x4096xf32, #tpu.memory_space<vmem>>, vector<64x128xf32>,
    %c0_71 = arith.constant 0 : index
    %c512_72 = arith.constant 512 : index
    %128 = vector.load %arg1[%c0_71, %c512_72] : memref<64x4096xf32, #tpu.memory_space<vmem>>, vector<64x128xf32>
    %129 = arith.mulf %128, %115 : vector<64x128xf32>
    %c0_73 = arith.constant 0 : index
    %c512_74 = arith.constant 512 : index
    %130 = vector.load %arg6[%c0_73, %c512_74] : memref<64x4096xf32, #tpu.memory_space<vmem>>, vector<64x128xf32>
    tpu.vector_store %arg6[%c0_73, %c512_74], %129 {strides = array<i32>} : memref<64x4096xf32, #tpu.memory_space<vmem>>, vector<64x128xf32>,
    %c0_75 = arith.constant 0 : index
    %c640_76 = arith.constant 640 : index
    %131 = vector.load %arg1[%c0_75, %c640_76] : memref<64x4096xf32, #tpu.memory_space<vmem>>, vector<64x128xf32>
    %132 = arith.mulf %131, %115 : vector<64x128xf32>
    %c0_77 = arith.constant 0 : index
    %c640_78 = arith.constant 640 : index
    %133 = vector.load %arg6[%c0_77, %c640_78] : memref<64x4096xf32, #tpu.memory_space<vmem>>, vector<64x128xf32>
    tpu.vector_store %arg6[%c0_77, %c640_78], %132 {strides = array<i32>} : memref<64x4096xf32, #tpu.memory_space<vmem>>, vector<64x128xf32>,
    %c0_79 = arith.constant 0 : index
    %c768_80 = arith.constant 768 : index
    %134 = vector.load %arg1[%c0_79, %c768_80] : memref<64x4096xf32, #tpu.memory_space<vmem>>, vector<64x128xf32>
    %135 = arith.mulf %134, %115 : vector<64x128xf32>
    %c0_81 = arith.constant 0 : index
    %c768_82 = arith.constant 768 : index
    %136 = vector.load %arg6[%c0_81, %c768_82] : memref<64x4096xf32, #tpu.memory_space<vmem>>, vector<64x128xf32>
    tpu.vector_store %arg6[%c0_81, %c768_82], %135 {strides = array<i32>} : memref<64x4096xf32, #tpu.memory_space<vmem>>, vector<64x128xf32>,
    %c0_83 = arith.constant 0 : index
    %c896_84 = arith.constant 896 : index
    %137 = vector.load %arg1[%c0_83, %c896_84] : memref<64x4096xf32, #tpu.memory_space<vmem>>, vector<64x128xf32>
    %138 = arith.mulf %137, %115 : vector<64x128xf32>
    %c0_85 = arith.constant 0 : index
    %c896_86 = arith.constant 896 : index
    %139 = vector.load %arg6[%c0_85, %c896_86] : memref<64x4096xf32, #tpu.memory_space<vmem>>, vector<64x128xf32>
    tpu.vector_store %arg6[%c0_85, %c896_86], %138 {strides = array<i32>} : memref<64x4096xf32, #tpu.memory_space<vmem>>, vector<64x128xf32>,
    %c0_87 = arith.constant 0 : index
    %c1024_88 = arith.constant 1024 : index
    %140 = vector.load %arg1[%c0_87, %c1024_88] : memref<64x4096xf32, #tpu.memory_space<vmem>>, vector<64x128xf32>
    %141 = arith.mulf %140, %115 : vector<64x128xf32>
    %c0_89 = arith.constant 0 : index
    %c1024_90 = arith.constant 1024 : index
    %142 = vector.load %arg6[%c0_89, %c1024_90] : memref<64x4096xf32, #tpu.memory_space<vmem>>, vector<64x128xf32>
    tpu.vector_store %arg6[%c0_89, %c1024_90], %141 {strides = array<i32>} : memref<64x4096xf32, #tpu.memory_space<vmem>>, vector<64x128xf32>,
    %c0_91 = arith.constant 0 : index
    %c1152_92 = arith.constant 1152 : index
    %143 = vector.load %arg1[%c0_91, %c1152_92] : memref<64x4096xf32, #tpu.memory_space<vmem>>, vector<64x128xf32>
    %144 = arith.mulf %143, %115 : vector<64x128xf32>
    %c0_93 = arith.constant 0 : index
    %c1152_94 = arith.constant 1152 : index
    %145 = vector.load %arg6[%c0_93, %c1152_94] : memref<64x4096xf32, #tpu.memory_space<vmem>>, vector<64x128xf32>
    tpu.vector_store %arg6[%c0_93, %c1152_94], %144 {strides = array<i32>} : memref<64x4096xf32, #tpu.memory_space<vmem>>, vector<64x128xf32>,
    %c0_95 = arith.constant 0 : index
    %c1280_96 = arith.constant 1280 : index
    %146 = vector.load %arg1[%c0_95, %c1280_96] : memref<64x4096xf32, #tpu.memory_space<vmem>>, vector<64x128xf32>
    %147 = arith.mulf %146, %115 : vector<64x128xf32>
    %c0_97 = arith.constant 0 : index
    %c1280_98 = arith.constant 1280 : index
    %148 = vector.load %arg6[%c0_97, %c1280_98] : memref<64x4096xf32, #tpu.memory_space<vmem>>, vector<64x128xf32>
    tpu.vector_store %arg6[%c0_97, %c1280_98], %147 {strides = array<i32>} : memref<64x4096xf32, #tpu.memory_space<vmem>>, vector<64x128xf32>,
    %c0_99 = arith.constant 0 : index
    %c1408_100 = arith.constant 1408 : index
    %149 = vector.load %arg1[%c0_99, %c1408_100] : memref<64x4096xf32, #tpu.memory_space<vmem>>, vector<64x128xf32>
    %150 = arith.mulf %149, %115 : vector<64x128xf32>
    %c0_101 = arith.constant 0 : index
    %c1408_102 = arith.constant 1408 : index
    %151 = vector.load %arg6[%c0_101, %c1408_102] : memref<64x4096xf32, #tpu.memory_space<vmem>>, vector<64x128xf32>
    tpu.vector_store %arg6[%c0_101, %c1408_102], %150 {strides = array<i32>} : memref<64x4096xf32, #tpu.memory_space<vmem>>, vector<64x128xf32>,
    %c0_103 = arith.constant 0 : index
    %c1536_104 = arith.constant 1536 : index
    %152 = vector.load %arg1[%c0_103, %c1536_104] : memref<64x4096xf32, #tpu.memory_space<vmem>>, vector<64x128xf32>
    %153 = arith.mulf %152, %115 : vector<64x128xf32>
    %c0_105 = arith.constant 0 : index
    %c1536_106 = arith.constant 1536 : index
    %154 = vector.load %arg6[%c0_105, %c1536_106] : memref<64x4096xf32, #tpu.memory_space<vmem>>, vector<64x128xf32>
    tpu.vector_store %arg6[%c0_105, %c1536_106], %153 {strides = array<i32>} : memref<64x4096xf32, #tpu.memory_space<vmem>>, vector<64x128xf32>,
    %c0_107 = arith.constant 0 : index
    %c1664_108 = arith.constant 1664 : index
    %155 = vector.load %arg1[%c0_107, %c1664_108] : memref<64x4096xf32, #tpu.memory_space<vmem>>, vector<64x128xf32>
    %156 = arith.mulf %155, %115 : vector<64x128xf32>
    %c0_109 = arith.constant 0 : index
    %c1664_110 = arith.constant 1664 : index
    %157 = vector.load %arg6[%c0_109, %c1664_110] : memref<64x4096xf32, #tpu.memory_space<vmem>>, vector<64x128xf32>
    tpu.vector_store %arg6[%c0_109, %c1664_110], %156 {strides = array<i32>} : memref<64x4096xf32, #tpu.memory_space<vmem>>, vector<64x128xf32>,
    %c0_111 = arith.constant 0 : index
    %c1792_112 = arith.constant 1792 : index
    %158 = vector.load %arg1[%c0_111, %c1792_112] : memref<64x4096xf32, #tpu.memory_space<vmem>>, vector<64x128xf32>
    %159 = arith.mulf %158, %115 : vector<64x128xf32>
    %c0_113 = arith.constant 0 : index
    %c1792_114 = arith.constant 1792 : index
    %160 = vector.load %arg6[%c0_113, %c1792_114] : memref<64x4096xf32, #tpu.memory_space<vmem>>, vector<64x128xf32>
    tpu.vector_store %arg6[%c0_113, %c1792_114], %159 {strides = array<i32>} : memref<64x4096xf32, #tpu.memory_space<vmem>>, vector<64x128xf32>,
    %c0_115 = arith.constant 0 : index
    %c1920_116 = arith.constant 1920 : index
    %161 = vector.load %arg1[%c0_115, %c1920_116] : memref<64x4096xf32, #tpu.memory_space<vmem>>, vector<64x128xf32>
    %162 = arith.mulf %161, %115 : vector<64x128xf32>
    %c0_117 = arith.constant 0 : index
    %c1920_118 = arith.constant 1920 : index
    %163 = vector.load %arg6[%c0_117, %c1920_118] : memref<64x4096xf32, #tpu.memory_space<vmem>>, vector<64x128xf32>
    tpu.vector_store %arg6[%c0_117, %c1920_118], %162 {strides = array<i32>} : memref<64x4096xf32, #tpu.memory_space<vmem>>, vector<64x128xf32>,
    %c0_119 = arith.constant 0 : index
    %c2048_120 = arith.constant 2048 : index
    %164 = vector.load %arg1[%c0_119, %c2048_120] : memref<64x4096xf32, #tpu.memory_space<vmem>>, vector<64x128xf32>
    %165 = arith.mulf %164, %115 : vector<64x128xf32>
    %c0_121 = arith.constant 0 : index
    %c2048_122 = arith.constant 2048 : index
    %166 = vector.load %arg6[%c0_121, %c2048_122] : memref<64x4096xf32, #tpu.memory_space<vmem>>, vector<64x128xf32>
    tpu.vector_store %arg6[%c0_121, %c2048_122], %165 {strides = array<i32>} : memref<64x4096xf32, #tpu.memory_space<vmem>>, vector<64x128xf32>,
    %c0_123 = arith.constant 0 : index
    %c2176_124 = arith.constant 2176 : index
    %167 = vector.load %arg1[%c0_123, %c2176_124] : memref<64x4096xf32, #tpu.memory_space<vmem>>, vector<64x128xf32>
    %168 = arith.mulf %167, %115 : vector<64x128xf32>
    %c0_125 = arith.constant 0 : index
    %c2176_126 = arith.constant 2176 : index
    %169 = vector.load %arg6[%c0_125, %c2176_126] : memref<64x4096xf32, #tpu.memory_space<vmem>>, vector<64x128xf32>
    tpu.vector_store %arg6[%c0_125, %c2176_126], %168 {strides = array<i32>} : memref<64x4096xf32, #tpu.memory_space<vmem>>, vector<64x128xf32>,
    %c0_127 = arith.constant 0 : index
    %c2304_128 = arith.constant 2304 : index
    %170 = vector.load %arg1[%c0_127, %c2304_128] : memref<64x4096xf32, #tpu.memory_space<vmem>>, vector<64x128xf32>
    %171 = arith.mulf %170, %115 : vector<64x128xf32>
    %c0_129 = arith.constant 0 : index
    %c2304_130 = arith.constant 2304 : index
    %172 = vector.load %arg6[%c0_129, %c2304_130] : memref<64x4096xf32, #tpu.memory_space<vmem>>, vector<64x128xf32>
    tpu.vector_store %arg6[%c0_129, %c2304_130], %171 {strides = array<i32>} : memref<64x4096xf32, #tpu.memory_space<vmem>>, vector<64x128xf32>,
    %c0_131 = arith.constant 0 : index
    %c2432_132 = arith.constant 2432 : index
    %173 = vector.load %arg1[%c0_131, %c2432_132] : memref<64x4096xf32, #tpu.memory_space<vmem>>, vector<64x128xf32>
    %174 = arith.mulf %173, %115 : vector<64x128xf32>
    %c0_133 = arith.constant 0 : index
    %c2432_134 = arith.constant 2432 : index
    %175 = vector.load %arg6[%c0_133, %c2432_134] : memref<64x4096xf32, #tpu.memory_space<vmem>>, vector<64x128xf32>
    tpu.vector_store %arg6[%c0_133, %c2432_134], %174 {strides = array<i32>} : memref<64x4096xf32, #tpu.memory_space<vmem>>, vector<64x128xf32>,
    %c0_135 = arith.constant 0 : index
    %c2560_136 = arith.constant 2560 : index
    %176 = vector.load %arg1[%c0_135, %c2560_136] : memref<64x4096xf32, #tpu.memory_space<vmem>>, vector<64x128xf32>
    %177 = arith.mulf %176, %115 : vector<64x128xf32>
    %c0_137 = arith.constant 0 : index
    %c2560_138 = arith.constant 2560 : index
    %178 = vector.load %arg6[%c0_137, %c2560_138] : memref<64x4096xf32, #tpu.memory_space<vmem>>, vector<64x128xf32>
    tpu.vector_store %arg6[%c0_137, %c2560_138], %177 {strides = array<i32>} : memref<64x4096xf32, #tpu.memory_space<vmem>>, vector<64x128xf32>,
    %c0_139 = arith.constant 0 : index
    %c2688_140 = arith.constant 2688 : index
    %179 = vector.load %arg1[%c0_139, %c2688_140] : memref<64x4096xf32, #tpu.memory_space<vmem>>, vector<64x128xf32>
    %180 = arith.mulf %179, %115 : vector<64x128xf32>
    %c0_141 = arith.constant 0 : index
    %c2688_142 = arith.constant 2688 : index
    %181 = vector.load %arg6[%c0_141, %c2688_142] : memref<64x4096xf32, #tpu.memory_space<vmem>>, vector<64x128xf32>
    tpu.vector_store %arg6[%c0_141, %c2688_142], %180 {strides = array<i32>} : memref<64x4096xf32, #tpu.memory_space<vmem>>, vector<64x128xf32>,
    %c0_143 = arith.constant 0 : index
    %c2816_144 = arith.constant 2816 : index
    %182 = vector.load %arg1[%c0_143, %c2816_144] : memref<64x4096xf32, #tpu.memory_space<vmem>>, vector<64x128xf32>
    %183 = arith.mulf %182, %115 : vector<64x128xf32>
    %c0_145 = arith.constant 0 : index
    %c2816_146 = arith.constant 2816 : index
    %184 = vector.load %arg6[%c0_145, %c2816_146] : memref<64x4096xf32, #tpu.memory_space<vmem>>, vector<64x128xf32>
    tpu.vector_store %arg6[%c0_145, %c2816_146], %183 {strides = array<i32>} : memref<64x4096xf32, #tpu.memory_space<vmem>>, vector<64x128xf32>,
    %c0_147 = arith.constant 0 : index
    %c2944_148 = arith.constant 2944 : index
    %185 = vector.load %arg1[%c0_147, %c2944_148] : memref<64x4096xf32, #tpu.memory_space<vmem>>, vector<64x128xf32>
    %186 = arith.mulf %185, %115 : vector<64x128xf32>
    %c0_149 = arith.constant 0 : index
    %c2944_150 = arith.constant 2944 : index
    %187 = vector.load %arg6[%c0_149, %c2944_150] : memref<64x4096xf32, #tpu.memory_space<vmem>>, vector<64x128xf32>
    tpu.vector_store %arg6[%c0_149, %c2944_150], %186 {strides = array<i32>} : memref<64x4096xf32, #tpu.memory_space<vmem>>, vector<64x128xf32>,
    %c0_151 = arith.constant 0 : index
    %c3072_152 = arith.constant 3072 : index
    %188 = vector.load %arg1[%c0_151, %c3072_152] : memref<64x4096xf32, #tpu.memory_space<vmem>>, vector<64x128xf32>
    %189 = arith.mulf %188, %115 : vector<64x128xf32>
    %c0_153 = arith.constant 0 : index
    %c3072_154 = arith.constant 3072 : index
    %190 = vector.load %arg6[%c0_153, %c3072_154] : memref<64x4096xf32, #tpu.memory_space<vmem>>, vector<64x128xf32>
    tpu.vector_store %arg6[%c0_153, %c3072_154], %189 {strides = array<i32>} : memref<64x4096xf32, #tpu.memory_space<vmem>>, vector<64x128xf32>,
    %c0_155 = arith.constant 0 : index
    %c3200_156 = arith.constant 3200 : index
    %191 = vector.load %arg1[%c0_155, %c3200_156] : memref<64x4096xf32, #tpu.memory_space<vmem>>, vector<64x128xf32>
    %192 = arith.mulf %191, %115 : vector<64x128xf32>
    %c0_157 = arith.constant 0 : index
    %c3200_158 = arith.constant 3200 : index
    %193 = vector.load %arg6[%c0_157, %c3200_158] : memref<64x4096xf32, #tpu.memory_space<vmem>>, vector<64x128xf32>
    tpu.vector_store %arg6[%c0_157, %c3200_158], %192 {strides = array<i32>} : memref<64x4096xf32, #tpu.memory_space<vmem>>, vector<64x128xf32>,
    %c0_159 = arith.constant 0 : index
    %c3328_160 = arith.constant 3328 : index
    %194 = vector.load %arg1[%c0_159, %c3328_160] : memref<64x4096xf32, #tpu.memory_space<vmem>>, vector<64x128xf32>
    %195 = arith.mulf %194, %115 : vector<64x128xf32>
    %c0_161 = arith.constant 0 : index
    %c3328_162 = arith.constant 3328 : index
    %196 = vector.load %arg6[%c0_161, %c3328_162] : memref<64x4096xf32, #tpu.memory_space<vmem>>, vector<64x128xf32>
    tpu.vector_store %arg6[%c0_161, %c3328_162], %195 {strides = array<i32>} : memref<64x4096xf32, #tpu.memory_space<vmem>>, vector<64x128xf32>,
    %c0_163 = arith.constant 0 : index
    %c3456_164 = arith.constant 3456 : index
    %197 = vector.load %arg1[%c0_163, %c3456_164] : memref<64x4096xf32, #tpu.memory_space<vmem>>, vector<64x128xf32>
    %198 = arith.mulf %197, %115 : vector<64x128xf32>
    %c0_165 = arith.constant 0 : index
    %c3456_166 = arith.constant 3456 : index
    %199 = vector.load %arg6[%c0_165, %c3456_166] : memref<64x4096xf32, #tpu.memory_space<vmem>>, vector<64x128xf32>
    tpu.vector_store %arg6[%c0_165, %c3456_166], %198 {strides = array<i32>} : memref<64x4096xf32, #tpu.memory_space<vmem>>, vector<64x128xf32>,
    %c0_167 = arith.constant 0 : index
    %c3584_168 = arith.constant 3584 : index
    %200 = vector.load %arg1[%c0_167, %c3584_168] : memref<64x4096xf32, #tpu.memory_space<vmem>>, vector<64x128xf32>
    %201 = arith.mulf %200, %115 : vector<64x128xf32>
    %c0_169 = arith.constant 0 : index
    %c3584_170 = arith.constant 3584 : index
    %202 = vector.load %arg6[%c0_169, %c3584_170] : memref<64x4096xf32, #tpu.memory_space<vmem>>, vector<64x128xf32>
    tpu.vector_store %arg6[%c0_169, %c3584_170], %201 {strides = array<i32>} : memref<64x4096xf32, #tpu.memory_space<vmem>>, vector<64x128xf32>,
    %c0_171 = arith.constant 0 : index
    %c3712_172 = arith.constant 3712 : index
    %203 = vector.load %arg1[%c0_171, %c3712_172] : memref<64x4096xf32, #tpu.memory_space<vmem>>, vector<64x128xf32>
    %204 = arith.mulf %203, %115 : vector<64x128xf32>
    %c0_173 = arith.constant 0 : index
    %c3712_174 = arith.constant 3712 : index
    %205 = vector.load %arg6[%c0_173, %c3712_174] : memref<64x4096xf32, #tpu.memory_space<vmem>>, vector<64x128xf32>
    tpu.vector_store %arg6[%c0_173, %c3712_174], %204 {strides = array<i32>} : memref<64x4096xf32, #tpu.memory_space<vmem>>, vector<64x128xf32>,
    %c0_175 = arith.constant 0 : index
    %c3840_176 = arith.constant 3840 : index
    %206 = vector.load %arg1[%c0_175, %c3840_176] : memref<64x4096xf32, #tpu.memory_space<vmem>>, vector<64x128xf32>
    %207 = arith.mulf %206, %115 : vector<64x128xf32>
    %c0_177 = arith.constant 0 : index
    %c3840_178 = arith.constant 3840 : index
    %208 = vector.load %arg6[%c0_177, %c3840_178] : memref<64x4096xf32, #tpu.memory_space<vmem>>, vector<64x128xf32>
    tpu.vector_store %arg6[%c0_177, %c3840_178], %207 {strides = array<i32>} : memref<64x4096xf32, #tpu.memory_space<vmem>>, vector<64x128xf32>,
    %c0_179 = arith.constant 0 : index
    %c3968_180 = arith.constant 3968 : index
    %209 = vector.load %arg1[%c0_179, %c3968_180] : memref<64x4096xf32, #tpu.memory_space<vmem>>, vector<64x128xf32>
    %210 = arith.mulf %209, %115 : vector<64x128xf32>
    %c0_181 = arith.constant 0 : index
    %c3968_182 = arith.constant 3968 : index
    %211 = vector.load %arg6[%c0_181, %c3968_182] : memref<64x4096xf32, #tpu.memory_space<vmem>>, vector<64x128xf32>
    tpu.vector_store %arg6[%c0_181, %c3968_182], %210 {strides = array<i32>} : memref<64x4096xf32, #tpu.memory_space<vmem>>, vector<64x128xf32>,
    return
  }
  func.func @transform_0(%arg0: i32) -> (i32, i32) {
    %c0_i32 = arith.constant 0 : i32
    %c0_i32_0 = arith.constant 0 : i32
    %c0_i32_1 = arith.constant 0 : i32
    return %c0_i32, %c0_i32_0 : i32, i32
  }
  func.func @transform_1(%arg0: i32) -> (i32, i32) {
    %c0_i32 = arith.constant 0 : i32
    %c0_i32_0 = arith.constant 0 : i32
    %c0_i32_1 = arith.constant 0 : i32
    return %c0_i32, %c0_i32_0 : i32, i32
  }
  func.func @transform_2(%arg0: i32) -> (i32, i32) {
    %c0_i32 = arith.constant 0 : i32
    %c0_i32_0 = arith.constant 0 : i32
    %c0_i32_1 = arith.constant 0 : i32
    return %c0_i32, %c0_i32_0 : i32, i32
  }
  func.func @transform_3(%arg0: i32) -> (i32, i32) {
    %c0_i32 = arith.constant 0 : i32
    %c0_i32_0 = arith.constant 0 : i32
    %c0_i32_1 = arith.constant 0 : i32
    return %c0_i32, %c0_i32_0 : i32, i32
  }
  func.func @transform_4(%arg0: i32) -> (i32, i32) {
    %c0_i32 = arith.constant 0 : i32
    %c0_i32_0 = arith.constant 0 : i32
    %c0_i32_1 = arith.constant 0 : i32
    return %c0_i32, %c0_i32_0 : i32, i32
  }
  func.func @transform_5(%arg0: i32) -> (i32, i32) {
    %c0_i32 = arith.constant 0 : i32
    %c0_i32_0 = arith.constant 0 : i32
    %c0_i32_1 = arith.constant 0 : i32
    return %c0_i32, %c0_i32_0 : i32, i32
  }
}

</mosaic_0001>

<llo_original>
// kernel: tpu_custom_call.1
$region0: #{tpu_custom_call.1}
  #allocation0 [shape = 'u32[]', space=smem, size = 0x4, offset = 0x4, fixed_abs, tag = 'smem constant byte address 0x4 - core index']
  #allocation1 [shape = 'u32[144,128]{1,0:T(1,128)}', space=vmem, size = 0x12000, scoped, tag = 'internal scratch']
  #allocation2 [shape = 'f32[64,128]{1,0:T(8,128)}', space=vmem, size = 0x8000, scoped, tag = 'scratch operand']
  %s0 = inlined_call_operand.hbm [shape: f32[64,4096], index: 0, kind: input, shape index: {}]
  %s1 = inlined_call_operand.vmem [shape: f32[32,8], index: 1, kind: input, shape index: {}]
  %s2 = inlined_call_operand.vmem [shape: f32[1,8], index: 2, kind: input, shape index: {}]
  %s3 = inlined_call_operand.vmem [shape: f32[32,8], index: 3, kind: input, shape index: {}]
  %s4 = inlined_call_operand.vmem [shape: f32[32,1], index: 4, kind: input, shape index: {}]
  %s5 = inlined_call_operand.hbm [shape: f32[64,4096], index: 5, kind: output, shape index: {}]
  %s6 = sld [smem:[#allocation0]]
  $region34: #{tpu_custom_call.1} parent=0
    _
  %s8 = ssub.s32 1, %s6
  %s9 = scalar_select 0, %s8, %s6
  $region1: #{tpu_custom_call.1} parent=0
    #allocation3 [shape = 'u8[1048576]{0}', space=vmem, size = 0x100000, scoped, tag = 'input window, operand 0, single buffered']
    #allocation4 [shape = 's32[1]{0}', space=sflag, size = 0x4, scoped, tag = 'scoped memory for tpu_custom_call.1']
    #allocation5 [shape = 's32[1]{0}', space=sflag, size = 0x4, scoped, tag = 'scoped memory for tpu_custom_call.1']
    #allocation6 [shape = 'u8[1048576]{0}', space=vmem, size = 0x100000, scoped, tag = 'output window, operand 0, single buffered']
    %10 = vsyncpa [#allocation4], 0
    %11 = vsyncpa [#allocation5], 0
    // Predicated region
    $region2: #{tpu_custom_call.1} parent=1 // pred_check
      _
    $region3: #{tpu_custom_call.1} parent=1 // pred_check_branch
      %13 = sbr.rel (0) target = $region5
    $region4: #{tpu_custom_call.1} parent=1 // pred_region
      %s15 = ssub.s32 32768, 32768
      %16 = vsyncadd [#allocation4], %s15
      %s17 = sshll.u32 [#allocation3], 4
      %s18 = int_to_ptr.vmem [resolvable:$true] %s17
      %23 = dma.hbm_to_vmem [thread:$0]  %s0, 32768, %s18, [#allocation4], 4096, 4096, 256
    $region5: #{tpu_custom_call.1} parent=1 // pred_fallthru
      _
    // Predicated region
    $region6: #{tpu_custom_call.1} parent=1 // pred_check
      _
    $region7: #{tpu_custom_call.1} parent=1 // pred_check_branch
      %25 = sbr.rel (0) target = $region9
    $region8: #{tpu_custom_call.1} parent=1 // pred_region
      _
    $region9: #{tpu_custom_call.1} parent=1 // pred_fallthru
      _
    // Predicated region
    $region10: #{tpu_custom_call.1} parent=1 // pred_check
      _
    $region11: #{tpu_custom_call.1} parent=1 // pred_check_branch
      %27 = sbr.rel (0) target = $region13
    $region12: #{tpu_custom_call.1} parent=1 // pred_region
      _
    $region13: #{tpu_custom_call.1} parent=1 // pred_fallthru
      _
    // Predicated region
    $region14: #{tpu_custom_call.1} parent=1 // pred_check
      _
    $region15: #{tpu_custom_call.1} parent=1 // pred_check_branch
      %29 = sbr.rel (0) target = $region17
    $region16: #{tpu_custom_call.1} parent=1 // pred_region
      _
    $region17: #{tpu_custom_call.1} parent=1 // pred_fallthru
      _
    // Predicated region
    $region18: #{tpu_custom_call.1} parent=1 // pred_check
      _
    $region19: #{tpu_custom_call.1} parent=1 // pred_check_branch
      %31 = sbr.rel (0) target = $region21
    $region20: #{tpu_custom_call.1} parent=1 // pred_region
      _
    $region21: #{tpu_custom_call.1} parent=1 // pred_fallthru
      _
    // Predicated region
    $region22: #{tpu_custom_call.1} parent=1 // pred_check
      _
    $region23: #{tpu_custom_call.1} parent=1 // pred_check_branch
      %33 = sbr.rel (0) target = $region25
    $region24: #{tpu_custom_call.1} parent=1 // pred_region
      %34 = dma.done [#allocation4], 32768
    $region25: #{tpu_custom_call.1} parent=1 // pred_fallthru
      _
    %v35 = vld [vmem:[#allocation3] sm:$0xff]
    %v36 = vld [vmem:[#allocation3 + $0x100] sm:$0xff]
    %v37 = vld [vmem:[#allocation3 + $0x200] sm:$0xff]
    %v38 = vld [vmem:[#allocation3 + $0x300] sm:$0xff]
    %v39 = vld [vmem:[#allocation3 + $0x400] sm:$0xff]
    %v40 = vld [vmem:[#allocation3 + $0x500] sm:$0xff]
    %v41 = vld [vmem:[#allocation3 + $0x600] sm:$0xff]
    %v42 = vld [vmem:[#allocation3 + $0x700] sm:$0xff]
    %v43 = vadd.f32 %v35, 0.0
    %v44 = vadd.f32 %v36, 0.0
    %v45 = vadd.f32 %v37, 0.0
    %v46 = vadd.f32 %v38, 0.0
    %v47 = vadd.f32 %v39, 0.0
    %v48 = vadd.f32 %v40, 0.0
    %v49 = vadd.f32 %v41, 0.0
    %v50 = vadd.f32 %v42, 0.0
    %v51 = vld [vmem:[#allocation3 + $0x8] sm:$0xff]
    %v52 = vld [vmem:[#allocation3 + $0x108] sm:$0xff]
    %v53 = vld [vmem:[#allocation3 + $0x208] sm:$0xff]
    %v54 = vld [vmem:[#allocation3 + $0x308] sm:$0xff]
    %v55 = vld [vmem:[#allocation3 + $0x408] sm:$0xff]
    %v56 = vld [vmem:[#allocation3 + $0x508] sm:$0xff]
    %v57 = vld [vmem:[#allocation3 + $0x608] sm:$0xff]
    %v58 = vld [vmem:[#allocation3 + $0x708] sm:$0xff]
    %v59 = vadd.f32 %v43, %v51
    %v60 = vadd.f32 %v44, %v52
    %v61 = vadd.f32 %v45, %v53
    %v62 = vadd.f32 %v46, %v54
    %v63 = vadd.f32 %v47, %v55
    %v64 = vadd.f32 %v48, %v56
    %v65 = vadd.f32 %v49, %v57
    %v66 = vadd.f32 %v50, %v58
    %v67 = vld [vmem:[#allocation3 + $0x10] sm:$0xff]
    %v68 = vld [vmem:[#allocation3 + $0x110] sm:$0xff]
    %v69 = vld [vmem:[#allocation3 + $0x210] sm:$0xff]
    %v70 = vld [vmem:[#allocation3 + $0x310] sm:$0xff]
    %v71 = vld [vmem:[#allocation3 + $0x410] sm:$0xff]
    %v72 = vld [vmem:[#allocation3 + $0x510] sm:$0xff]
    %v73 = vld [vmem:[#allocation3 + $0x610] sm:$0xff]
    %v74 = vld [vmem:[#allocation3 + $0x710] sm:$0xff]
    %v75 = vadd.f32 %v59, %v67
    %v76 = vadd.f32 %v60, %v68
    %v77 = vadd.f32 %v61, %v69
    %v78 = vadd.f32 %v62, %v70
    %v79 = vadd.f32 %v63, %v71
    %v80 = vadd.f32 %v64, %v72
    %v81 = vadd.f32 %v65, %v73
    %v82 = vadd.f32 %v66, %v74
    %v83 = vld [vmem:[#allocation3 + $0x18] sm:$0xff]
    %v84 = vld [vmem:[#allocation3 + $0x118] sm:$0xff]
    %v85 = vld [vmem:[#allocation3 + $0x218] sm:$0xff]
    %v86 = vld [vmem:[#allocation3 + $0x318] sm:$0xff]
    %v87 = vld [vmem:[#allocation3 + $0x418] sm:$0xff]
    %v88 = vld [vmem:[#allocation3 + $0x518] sm:$0xff]
    %v89 = vld [vmem:[#allocation3 + $0x618] sm:$0xff]
    %v90 = vld [vmem:[#allocation3 + $0x718] sm:$0xff]
    %v91 = vadd.f32 %v75, %v83
    %v92 = vadd.f32 %v76, %v84
    %v93 = vadd.f32 %v77, %v85
    %v94 = vadd.f32 %v78, %v86
    %v95 = vadd.f32 %v79, %v87
    %v96 = vadd.f32 %v80, %v88
    %v97 = vadd.f32 %v81, %v89
    %v98 = vadd.f32 %v82, %v90
    %v99 = vld [vmem:[#allocation3 + $0x20] sm:$0xff]
    %v100 = vld [vmem:[#allocation3 + $0x120] sm:$0xff]
    %v101 = vld [vmem:[#allocation3 + $0x220] sm:$0xff]
    %v102 = vld [vmem:[#allocation3 + $0x320] sm:$0xff]
    %v103 = vld [vmem:[#allocation3 + $0x420] sm:$0xff]
    %v104 = vld [vmem:[#allocation3 + $0x520] sm:$0xff]
    %v105 = vld [vmem:[#allocation3 + $0x620] sm:$0xff]
    %v106 = vld [vmem:[#allocation3 + $0x720] sm:$0xff]
    %v107 = vadd.f32 %v91, %v99
    %v108 = vadd.f32 %v92, %v100
    %v109 = vadd.f32 %v93, %v101
    %v110 = vadd.f32 %v94, %v102
    %v111 = vadd.f32 %v95, %v103
    %v112 = vadd.f32 %v96, %v104
    %v113 = vadd.f32 %v97, %v105
    %v114 = vadd.f32 %v98, %v106
    %v115 = vld [vmem:[#allocation3 + $0x28] sm:$0xff]
    %v116 = vld [vmem:[#allocation3 + $0x128] sm:$0xff]
    %v117 = vld [vmem:[#allocation3 + $0x228] sm:$0xff]
    %v118 = vld [vmem:[#allocation3 + $0x328] sm:$0xff]
    %v119 = vld [vmem:[#allocation3 + $0x428] sm:$0xff]
    %v120 = vld [vmem:[#allocation3 + $0x528] sm:$0xff]
    %v121 = vld [vmem:[#allocation3 + $0x628] sm:$0xff]
    %v122 = vld [vmem:[#allocation3 + $0x728] sm:$0xff]
    %v123 = vadd.f32 %v107, %v115
    %v124 = vadd.f32 %v108, %v116
    %v125 = vadd.f32 %v109, %v117
    %v126 = vadd.f32 %v110, %v118
    %v127 = vadd.f32 %v111, %v119
    %v128 = vadd.f32 %v112, %v120
    %v129 = vadd.f32 %v113, %v121
    %v130 = vadd.f32 %v114, %v122
    %v131 = vld [vmem:[#allocation3 + $0x30] sm:$0xff]
    %v132 = vld [vmem:[#allocation3 + $0x130] sm:$0xff]
    %v133 = vld [vmem:[#allocation3 + $0x230] sm:$0xff]
    %v134 = vld [vmem:[#allocation3 + $0x330] sm:$0xff]
    %v135 = vld [vmem:[#allocation3 + $0x430] sm:$0xff]
    %v136 = vld [vmem:[#allocation3 + $0x530] sm:$0xff]
    %v137 = vld [vmem:[#allocation3 + $0x630] sm:$0xff]
    %v138 = vld [vmem:[#allocation3 + $0x730] sm:$0xff]
    %v139 = vadd.f32 %v123, %v131
    %v140 = vadd.f32 %v124, %v132
    %v141 = vadd.f32 %v125, %v133
    %v142 = vadd.f32 %v126, %v134
    %v143 = vadd.f32 %v127, %v135
    %v144 = vadd.f32 %v128, %v136
    %v145 = vadd.f32 %v129, %v137
    %v146 = vadd.f32 %v130, %v138
    %v147 = vld [vmem:[#allocation3 + $0x38] sm:$0xff]
    %v148 = vld [vmem:[#allocation3 + $0x138] sm:$0xff]
    %v149 = vld [vmem:[#allocation3 + $0x238] sm:$0xff]
    %v150 = vld [vmem:[#allocation3 + $0x338] sm:$0xff]
    %v151 = vld [vmem:[#allocation3 + $0x438] sm:$0xff]
    %v152 = vld [vmem:[#allocation3 + $0x538] sm:$0xff]
    %v153 = vld [vmem:[#allocation3 + $0x638] sm:$0xff]
    %v154 = vld [vmem:[#allocation3 + $0x738] sm:$0xff]
    %v155 = vadd.f32 %v139, %v147
    %v156 = vadd.f32 %v140, %v148
    %v157 = vadd.f32 %v141, %v149
    %v158 = vadd.f32 %v142, %v150
    %v159 = vadd.f32 %v143, %v151
    %v160 = vadd.f32 %v144, %v152
    %v161 = vadd.f32 %v145, %v153
    %v162 = vadd.f32 %v146, %v154
    %v163 = vld [vmem:[#allocation3 + $0x40] sm:$0xff]
    %v164 = vld [vmem:[#allocation3 + $0x140] sm:$0xff]
    %v165 = vld [vmem:[#allocation3 + $0x240] sm:$0xff]
    %v166 = vld [vmem:[#allocation3 + $0x340] sm:$0xff]
    %v167 = vld [vmem:[#allocation3 + $0x440] sm:$0xff]
    %v168 = vld [vmem:[#allocation3 + $0x540] sm:$0xff]
    %v169 = vld [vmem:[#allocation3 + $0x640] sm:$0xff]
    %v170 = vld [vmem:[#allocation3 + $0x740] sm:$0xff]
    %v171 = vadd.f32 %v155, %v163
    %v172 = vadd.f32 %v156, %v164
    %v173 = vadd.f32 %v157, %v165
    %v174 = vadd.f32 %v158, %v166
    %v175 = vadd.f32 %v159, %v167
    %v176 = vadd.f32 %v160, %v168
    %v177 = vadd.f32 %v161, %v169
    %v178 = vadd.f32 %v162, %v170
    %v179 = vld [vmem:[#allocation3 + $0x48] sm:$0xff]
    %v180 = vld [vmem:[#allocation3 + $0x148] sm:$0xff]
    %v181 = vld [vmem:[#allocation3 + $0x248] sm:$0xff]
    %v182 = vld [vmem:[#allocation3 + $0x348] sm:$0xff]
    %v183 = vld [vmem:[#allocation3 + $0x448] sm:$0xff]
    %v184 = vld [vmem:[#allocation3 + $0x548] sm:$0xff]
    %v185 = vld [vmem:[#allocation3 + $0x648] sm:$0xff]
    %v186 = vld [vmem:[#allocation3 + $0x748] sm:$0xff]
    %v187 = vadd.f32 %v171, %v179
    %v188 = vadd.f32 %v172, %v180
    %v189 = vadd.f32 %v173, %v181
    %v190 = vadd.f32 %v174, %v182
    %v191 = vadd.f32 %v175, %v183
    %v192 = vadd.f32 %v176, %v184
    %v193 = vadd.f32 %v177, %v185
    %v194 = vadd.f32 %v178, %v186
    %v195 = vld [vmem:[#allocation3 + $0x50] sm:$0xff]
    %v196 = vld [vmem:[#allocation3 + $0x150] sm:$0xff]
    %v197 = vld [vmem:[#allocation3 + $0x250] sm:$0xff]
    %v198 = vld [vmem:[#allocation3 + $0x350] sm:$0xff]
    %v199 = vld [vmem:[#allocation3 + $0x450] sm:$0xff]
    %v200 = vld [vmem:[#allocation3 + $0x550] sm:$0xff]
    %v201 = vld [vmem:[#allocation3 + $0x650] sm:$0xff]
    %v202 = vld [vmem:[#allocation3 + $0x750] sm:$0xff]
    %v203 = vadd.f32 %v187, %v195
    %v204 = vadd.f32 %v188, %v196
    %v205 = vadd.f32 %v189, %v197
    %v206 = vadd.f32 %v190, %v198
    %v207 = vadd.f32 %v191, %v199
    %v208 = vadd.f32 %v192, %v200
    %v209 = vadd.f32 %v193, %v201
    %v210 = vadd.f32 %v194, %v202
    %v211 = vld [vmem:[#allocation3 + $0x58] sm:$0xff]
    %v212 = vld [vmem:[#allocation3 + $0x158] sm:$0xff]
    %v213 = vld [vmem:[#allocation3 + $0x258] sm:$0xff]
    %v214 = vld [vmem:[#allocation3 + $0x358] sm:$0xff]
    %v215 = vld [vmem:[#allocation3 + $0x458] sm:$0xff]
    %v216 = vld [vmem:[#allocation3 + $0x558] sm:$0xff]
    %v217 = vld [vmem:[#allocation3 + $0x658] sm:$0xff]
    %v218 = vld [vmem:[#allocation3 + $0x758] sm:$0xff]
    %v219 = vadd.f32 %v203, %v211
    %v220 = vadd.f32 %v204, %v212
    %v221 = vadd.f32 %v205, %v213
    %v222 = vadd.f32 %v206, %v214
    %v223 = vadd.f32 %v207, %v215
    %v224 = vadd.f32 %v208, %v216
    %v225 = vadd.f32 %v209, %v217
    %v226 = vadd.f32 %v210, %v218
    %v227 = vld [vmem:[#allocation3 + $0x60] sm:$0xff]
    %v228 = vld [vmem:[#allocation3 + $0x160] sm:$0xff]
    %v229 = vld [vmem:[#allocation3 + $0x260] sm:$0xff]
    %v230 = vld [vmem:[#allocation3 + $0x360] sm:$0xff]
    %v231 = vld [vmem:[#allocation3 + $0x460] sm:$0xff]
    %v232 = vld [vmem:[#allocation3 + $0x560] sm:$0xff]
    %v233 = vld [vmem:[#allocation3 + $0x660] sm:$0xff]
    %v234 = vld [vmem:[#allocation3 + $0x760] sm:$0xff]
    %v235 = vadd.f32 %v219, %v227
    %v236 = vadd.f32 %v220, %v228
    %v237 = vadd.f32 %v221, %v229
    %v238 = vadd.f32 %v222, %v230
    %v239 = vadd.f32 %v223, %v231
    %v240 = vadd.f32 %v224, %v232
    %v241 = vadd.f32 %v225, %v233
    %v242 = vadd.f32 %v226, %v234
    %v243 = vld [vmem:[#allocation3 + $0x68] sm:$0xff]
    %v244 = vld [vmem:[#allocation3 + $0x168] sm:$0xff]
    %v245 = vld [vmem:[#allocation3 + $0x268] sm:$0xff]
    %v246 = vld [vmem:[#allocation3 + $0x368] sm:$0xff]
    %v247 = vld [vmem:[#allocation3 + $0x468] sm:$0xff]
    %v248 = vld [vmem:[#allocation3 + $0x568] sm:$0xff]
    %v249 = vld [vmem:[#allocation3 + $0x668] sm:$0xff]
    %v250 = vld [vmem:[#allocation3 + $0x768] sm:$0xff]
    %v251 = vadd.f32 %v235, %v243
    %v252 = vadd.f32 %v236, %v244
    %v253 = vadd.f32 %v237, %v245
    %v254 = vadd.f32 %v238, %v246
    %v255 = vadd.f32 %v239, %v247
    %v256 = vadd.f32 %v240, %v248
    %v257 = vadd.f32 %v241, %v249
    %v258 = vadd.f32 %v242, %v250
    %v259 = vld [vmem:[#allocation3 + $0x70] sm:$0xff]
    %v260 = vld [vmem:[#allocation3 + $0x170] sm:$0xff]
    %v261 = vld [vmem:[#allocation3 + $0x270] sm:$0xff]
    %v262 = vld [vmem:[#allocation3 + $0x370] sm:$0xff]
    %v263 = vld [vmem:[#allocation3 + $0x470] sm:$0xff]
    %v264 = vld [vmem:[#allocation3 + $0x570] sm:$0xff]
    %v265 = vld [vmem:[#allocation3 + $0x670] sm:$0xff]
    %v266 = vld [vmem:[#allocation3 + $0x770] sm:$0xff]
    %v267 = vadd.f32 %v251, %v259
    %v268 = vadd.f32 %v252, %v260
    %v269 = vadd.f32 %v253, %v261
    %v270 = vadd.f32 %v254, %v262
    %v271 = vadd.f32 %v255, %v263
    %v272 = vadd.f32 %v256, %v264
    %v273 = vadd.f32 %v257, %v265
    %v274 = vadd.f32 %v258, %v266
    %v275 = vld [vmem:[#allocation3 + $0x78] sm:$0xff]
    %v276 = vld [vmem:[#allocation3 + $0x178] sm:$0xff]
    %v277 = vld [vmem:[#allocation3 + $0x278] sm:$0xff]
    %v278 = vld [vmem:[#allocation3 + $0x378] sm:$0xff]
    %v279 = vld [vmem:[#allocation3 + $0x478] sm:$0xff]
    %v280 = vld [vmem:[#allocation3 + $0x578] sm:$0xff]
    %v281 = vld [vmem:[#allocation3 + $0x678] sm:$0xff]
    %v282 = vld [vmem:[#allocation3 + $0x778] sm:$0xff]
    %v283 = vadd.f32 %v267, %v275
    %v284 = vadd.f32 %v268, %v276
    %v285 = vadd.f32 %v269, %v277
    %v286 = vadd.f32 %v270, %v278
    %v287 = vadd.f32 %v271, %v279
    %v288 = vadd.f32 %v272, %v280
    %v289 = vadd.f32 %v273, %v281
    %v290 = vadd.f32 %v274, %v282
    %v291 = vld [vmem:[#allocation3 + $0x80] sm:$0xff]
    %v292 = vld [vmem:[#allocation3 + $0x180] sm:$0xff]
    %v293 = vld [vmem:[#allocation3 + $0x280] sm:$0xff]
    %v294 = vld [vmem:[#allocation3 + $0x380] sm:$0xff]
    %v295 = vld [vmem:[#allocation3 + $0x480] sm:$0xff]
    %v296 = vld [vmem:[#allocation3 + $0x580] sm:$0xff]
    %v297 = vld [vmem:[#allocation3 + $0x680] sm:$0xff]
    %v298 = vld [vmem:[#allocation3 + $0x780] sm:$0xff]
    %v299 = vadd.f32 %v283, %v291
    %v300 = vadd.f32 %v284, %v292
    %v301 = vadd.f32 %v285, %v293
    %v302 = vadd.f32 %v286, %v294
    %v303 = vadd.f32 %v287, %v295
    %v304 = vadd.f32 %v288, %v296
    %v305 = vadd.f32 %v289, %v297
    %v306 = vadd.f32 %v290, %v298
    %v307 = vld [vmem:[#allocation3 + $0x88] sm:$0xff]
    %v308 = vld [vmem:[#allocation3 + $0x188] sm:$0xff]
    %v309 = vld [vmem:[#allocation3 + $0x288] sm:$0xff]
    %v310 = vld [vmem:[#allocation3 + $0x388] sm:$0xff]
    %v311 = vld [vmem:[#allocation3 + $0x488] sm:$0xff]
    %v312 = vld [vmem:[#allocation3 + $0x588] sm:$0xff]
    %v313 = vld [vmem:[#allocation3 + $0x688] sm:$0xff]
    %v314 = vld [vmem:[#allocation3 + $0x788] sm:$0xff]
    %v315 = vadd.f32 %v299, %v307
    %v316 = vadd.f32 %v300, %v308
    %v317 = vadd.f32 %v301, %v309
    %v318 = vadd.f32 %v302, %v310
    %v319 = vadd.f32 %v303, %v311
    %v320 = vadd.f32 %v304, %v312
    %v321 = vadd.f32 %v305, %v313
    %v322 = vadd.f32 %v306, %v314
    %v323 = vld [vmem:[#allocation3 + $0x90] sm:$0xff]
    %v324 = vld [vmem:[#allocation3 + $0x190] sm:$0xff]
    %v325 = vld [vmem:[#allocation3 + $0x290] sm:$0xff]
    %v326 = vld [vmem:[#allocation3 + $0x390] sm:$0xff]
    %v327 = vld [vmem:[#allocation3 + $0x490] sm:$0xff]
    %v328 = vld [vmem:[#allocation3 + $0x590] sm:$0xff]
    %v329 = vld [vmem:[#allocation3 + $0x690] sm:$0xff]
    %v330 = vld [vmem:[#allocation3 + $0x790] sm:$0xff]
    %v331 = vadd.f32 %v315, %v323
    %v332 = vadd.f32 %v316, %v324
    %v333 = vadd.f32 %v317, %v325
    %v334 = vadd.f32 %v318, %v326
    %v335 = vadd.f32 %v319, %v327
    %v336 = vadd.f32 %v320, %v328
    %v337 = vadd.f32 %v321, %v329
    %v338 = vadd.f32 %v322, %v330
    %v339 = vld [vmem:[#allocation3 + $0x98] sm:$0xff]
    %v340 = vld [vmem:[#allocation3 + $0x198] sm:$0xff]
    %v341 = vld [vmem:[#allocation3 + $0x298] sm:$0xff]
    %v342 = vld [vmem:[#allocation3 + $0x398] sm:$0xff]
    %v343 = vld [vmem:[#allocation3 + $0x498] sm:$0xff]
    %v344 = vld [vmem:[#allocation3 + $0x598] sm:$0xff]
    %v345 = vld [vmem:[#allocation3 + $0x698] sm:$0xff]
    %v346 = vld [vmem:[#allocation3 + $0x798] sm:$0xff]
    %v347 = vadd.f32 %v331, %v339
    %v348 = vadd.f32 %v332, %v340
    %v349 = vadd.f32 %v333, %v341
    %v350 = vadd.f32 %v334, %v342
    %v351 = vadd.f32 %v335, %v343
    %v352 = vadd.f32 %v336, %v344
    %v353 = vadd.f32 %v337, %v345
    %v354 = vadd.f32 %v338, %v346
    %v355 = vld [vmem:[#allocation3 + $0xa0] sm:$0xff]
    %v356 = vld [vmem:[#allocation3 + $0x1a0] sm:$0xff]
    %v357 = vld [vmem:[#allocation3 + $0x2a0] sm:$0xff]
    %v358 = vld [vmem:[#allocation3 + $0x3a0] sm:$0xff]
    %v359 = vld [vmem:[#allocation3 + $0x4a0] sm:$0xff]
    %v360 = vld [vmem:[#allocation3 + $0x5a0] sm:$0xff]
    %v361 = vld [vmem:[#allocation3 + $0x6a0] sm:$0xff]
    %v362 = vld [vmem:[#allocation3 + $0x7a0] sm:$0xff]
    %v363 = vadd.f32 %v347, %v355
    %v364 = vadd.f32 %v348, %v356
    %v365 = vadd.f32 %v349, %v357
    %v366 = vadd.f32 %v350, %v358
    %v367 = vadd.f32 %v351, %v359
    %v368 = vadd.f32 %v352, %v360
    %v369 = vadd.f32 %v353, %v361
    %v370 = vadd.f32 %v354, %v362
    %v371 = vld [vmem:[#allocation3 + $0xa8] sm:$0xff]
    %v372 = vld [vmem:[#allocation3 + $0x1a8] sm:$0xff]
    %v373 = vld [vmem:[#allocation3 + $0x2a8] sm:$0xff]
    %v374 = vld [vmem:[#allocation3 + $0x3a8] sm:$0xff]
    %v375 = vld [vmem:[#allocation3 + $0x4a8] sm:$0xff]
    %v376 = vld [vmem:[#allocation3 + $0x5a8] sm:$0xff]
    %v377 = vld [vmem:[#allocation3 + $0x6a8] sm:$0xff]
    %v378 = vld [vmem:[#allocation3 + $0x7a8] sm:$0xff]
    %v379 = vadd.f32 %v363, %v371
    %v380 = vadd.f32 %v364, %v372
    %v381 = vadd.f32 %v365, %v373
    %v382 = vadd.f32 %v366, %v374
    %v383 = vadd.f32 %v367, %v375
    %v384 = vadd.f32 %v368, %v376
    %v385 = vadd.f32 %v369, %v377
    %v386 = vadd.f32 %v370, %v378
    %v387 = vld [vmem:[#allocation3 + $0xb0] sm:$0xff]
    %v388 = vld [vmem:[#allocation3 + $0x1b0] sm:$0xff]
    %v389 = vld [vmem:[#allocation3 + $0x2b0] sm:$0xff]
    %v390 = vld [vmem:[#allocation3 + $0x3b0] sm:$0xff]
    %v391 = vld [vmem:[#allocation3 + $0x4b0] sm:$0xff]
    %v392 = vld [vmem:[#allocation3 + $0x5b0] sm:$0xff]
    %v393 = vld [vmem:[#allocation3 + $0x6b0] sm:$0xff]
    %v394 = vld [vmem:[#allocation3 + $0x7b0] sm:$0xff]
    %v395 = vadd.f32 %v379, %v387
    %v396 = vadd.f32 %v380, %v388
    %v397 = vadd.f32 %v381, %v389
    %v398 = vadd.f32 %v382, %v390
    %v399 = vadd.f32 %v383, %v391
    %v400 = vadd.f32 %v384, %v392
    %v401 = vadd.f32 %v385, %v393
    %v402 = vadd.f32 %v386, %v394
    %v403 = vld [vmem:[#allocation3 + $0xb8] sm:$0xff]
    %v404 = vld [vmem:[#allocation3 + $0x1b8] sm:$0xff]
    %v405 = vld [vmem:[#allocation3 + $0x2b8] sm:$0xff]
    %v406 = vld [vmem:[#allocation3 + $0x3b8] sm:$0xff]
    %v407 = vld [vmem:[#allocation3 + $0x4b8] sm:$0xff]
    %v408 = vld [vmem:[#allocation3 + $0x5b8] sm:$0xff]
    %v409 = vld [vmem:[#allocation3 + $0x6b8] sm:$0xff]
    %v410 = vld [vmem:[#allocation3 + $0x7b8] sm:$0xff]
    %v411 = vadd.f32 %v395, %v403
    %v412 = vadd.f32 %v396, %v404
    %v413 = vadd.f32 %v397, %v405
    %v414 = vadd.f32 %v398, %v406
    %v415 = vadd.f32 %v399, %v407
    %v416 = vadd.f32 %v400, %v408
    %v417 = vadd.f32 %v401, %v409
    %v418 = vadd.f32 %v402, %v410
    %v419 = vld [vmem:[#allocation3 + $0xc0] sm:$0xff]
    %v420 = vld [vmem:[#allocation3 + $0x1c0] sm:$0xff]
    %v421 = vld [vmem:[#allocation3 + $0x2c0] sm:$0xff]
    %v422 = vld [vmem:[#allocation3 + $0x3c0] sm:$0xff]
    %v423 = vld [vmem:[#allocation3 + $0x4c0] sm:$0xff]
    %v424 = vld [vmem:[#allocation3 + $0x5c0] sm:$0xff]
    %v425 = vld [vmem:[#allocation3 + $0x6c0] sm:$0xff]
    %v426 = vld [vmem:[#allocation3 + $0x7c0] sm:$0xff]
    %v427 = vadd.f32 %v411, %v419
    %v428 = vadd.f32 %v412, %v420
    %v429 = vadd.f32 %v413, %v421
    %v430 = vadd.f32 %v414, %v422
    %v431 = vadd.f32 %v415, %v423
    %v432 = vadd.f32 %v416, %v424
    %v433 = vadd.f32 %v417, %v425
    %v434 = vadd.f32 %v418, %v426
    %v435 = vld [vmem:[#allocation3 + $0xc8] sm:$0xff]
    %v436 = vld [vmem:[#allocation3 + $0x1c8] sm:$0xff]
    %v437 = vld [vmem:[#allocation3 + $0x2c8] sm:$0xff]
    %v438 = vld [vmem:[#allocation3 + $0x3c8] sm:$0xff]
    %v439 = vld [vmem:[#allocation3 + $0x4c8] sm:$0xff]
    %v440 = vld [vmem:[#allocation3 + $0x5c8] sm:$0xff]
    %v441 = vld [vmem:[#allocation3 + $0x6c8] sm:$0xff]
    %v442 = vld [vmem:[#allocation3 + $0x7c8] sm:$0xff]
    %v443 = vadd.f32 %v427, %v435
    %v444 = vadd.f32 %v428, %v436
    %v445 = vadd.f32 %v429, %v437
    %v446 = vadd.f32 %v430, %v438
    %v447 = vadd.f32 %v431, %v439
    %v448 = vadd.f32 %v432, %v440
    %v449 = vadd.f32 %v433, %v441
    %v450 = vadd.f32 %v434, %v442
    %v451 = vld [vmem:[#allocation3 + $0xd0] sm:$0xff]
    %v452 = vld [vmem:[#allocation3 + $0x1d0] sm:$0xff]
    %v453 = vld [vmem:[#allocation3 + $0x2d0] sm:$0xff]
    %v454 = vld [vmem:[#allocation3 + $0x3d0] sm:$0xff]
    %v455 = vld [vmem:[#allocation3 + $0x4d0] sm:$0xff]
    %v456 = vld [vmem:[#allocation3 + $0x5d0] sm:$0xff]
    %v457 = vld [vmem:[#allocation3 + $0x6d0] sm:$0xff]
    %v458 = vld [vmem:[#allocation3 + $0x7d0] sm:$0xff]
    %v459 = vadd.f32 %v443, %v451
    %v460 = vadd.f32 %v444, %v452
    %v461 = vadd.f32 %v445, %v453
    %v462 = vadd.f32 %v446, %v454
    %v463 = vadd.f32 %v447, %v455
    %v464 = vadd.f32 %v448, %v456
    %v465 = vadd.f32 %v449, %v457
    %v466 = vadd.f32 %v450, %v458
    %v467 = vld [vmem:[#allocation3 + $0xd8] sm:$0xff]
    %v468 = vld [vmem:[#allocation3 + $0x1d8] sm:$0xff]
    %v469 = vld [vmem:[#allocation3 + $0x2d8] sm:$0xff]
    %v470 = vld [vmem:[#allocation3 + $0x3d8] sm:$0xff]
    %v471 = vld [vmem:[#allocation3 + $0x4d8] sm:$0xff]
    %v472 = vld [vmem:[#allocation3 + $0x5d8] sm:$0xff]
    %v473 = vld [vmem:[#allocation3 + $0x6d8] sm:$0xff]
    %v474 = vld [vmem:[#allocation3 + $0x7d8] sm:$0xff]
    %v475 = vadd.f32 %v459, %v467
    %v476 = vadd.f32 %v460, %v468
    %v477 = vadd.f32 %v461, %v469
    %v478 = vadd.f32 %v462, %v470
    %v479 = vadd.f32 %v463, %v471
    %v480 = vadd.f32 %v464, %v472
    %v481 = vadd.f32 %v465, %v473
    %v482 = vadd.f32 %v466, %v474
    %v483 = vld [vmem:[#allocation3 + $0xe0] sm:$0xff]
    %v484 = vld [vmem:[#allocation3 + $0x1e0] sm:$0xff]
    %v485 = vld [vmem:[#allocation3 + $0x2e0] sm:$0xff]
    %v486 = vld [vmem:[#allocation3 + $0x3e0] sm:$0xff]
    %v487 = vld [vmem:[#allocation3 + $0x4e0] sm:$0xff]
    %v488 = vld [vmem:[#allocation3 + $0x5e0] sm:$0xff]
    %v489 = vld [vmem:[#allocation3 + $0x6e0] sm:$0xff]
    %v490 = vld [vmem:[#allocation3 + $0x7e0] sm:$0xff]
    %v491 = vadd.f32 %v475, %v483
    %v492 = vadd.f32 %v476, %v484
    %v493 = vadd.f32 %v477, %v485
    %v494 = vadd.f32 %v478, %v486
    %v495 = vadd.f32 %v479, %v487
    %v496 = vadd.f32 %v480, %v488
    %v497 = vadd.f32 %v481, %v489
    %v498 = vadd.f32 %v482, %v490
    %v499 = vld [vmem:[#allocation3 + $0xe8] sm:$0xff]
    %v500 = vld [vmem:[#allocation3 + $0x1e8] sm:$0xff]
    %v501 = vld [vmem:[#allocation3 + $0x2e8] sm:$0xff]
    %v502 = vld [vmem:[#allocation3 + $0x3e8] sm:$0xff]
    %v503 = vld [vmem:[#allocation3 + $0x4e8] sm:$0xff]
    %v504 = vld [vmem:[#allocation3 + $0x5e8] sm:$0xff]
    %v505 = vld [vmem:[#allocation3 + $0x6e8] sm:$0xff]
    %v506 = vld [vmem:[#allocation3 + $0x7e8] sm:$0xff]
    %v507 = vadd.f32 %v491, %v499
    %v508 = vadd.f32 %v492, %v500
    %v509 = vadd.f32 %v493, %v501
    %v510 = vadd.f32 %v494, %v502
    %v511 = vadd.f32 %v495, %v503
    %v512 = vadd.f32 %v496, %v504
    %v513 = vadd.f32 %v497, %v505
    %v514 = vadd.f32 %v498, %v506
    %v515 = vld [vmem:[#allocation3 + $0xf0] sm:$0xff]
    %v516 = vld [vmem:[#allocation3 + $0x1f0] sm:$0xff]
    %v517 = vld [vmem:[#allocation3 + $0x2f0] sm:$0xff]
    %v518 = vld [vmem:[#allocation3 + $0x3f0] sm:$0xff]
    %v519 = vld [vmem:[#allocation3 + $0x4f0] sm:$0xff]
    %v520 = vld [vmem:[#allocation3 + $0x5f0] sm:$0xff]
    %v521 = vld [vmem:[#allocation3 + $0x6f0] sm:$0xff]
    %v522 = vld [vmem:[#allocation3 + $0x7f0] sm:$0xff]
    %v523 = vadd.f32 %v507, %v515
    %v524 = vadd.f32 %v508, %v516
    %v525 = vadd.f32 %v509, %v517
    %v526 = vadd.f32 %v510, %v518
    %v527 = vadd.f32 %v511, %v519
    %v528 = vadd.f32 %v512, %v520
    %v529 = vadd.f32 %v513, %v521
    %v530 = vadd.f32 %v514, %v522
    %v531 = vld [vmem:[#allocation3 + $0xf8] sm:$0xff]
    %v532 = vld [vmem:[#allocation3 + $0x1f8] sm:$0xff]
    %v533 = vld [vmem:[#allocation3 + $0x2f8] sm:$0xff]
    %v534 = vld [vmem:[#allocation3 + $0x3f8] sm:$0xff]
    %v535 = vld [vmem:[#allocation3 + $0x4f8] sm:$0xff]
    %v536 = vld [vmem:[#allocation3 + $0x5f8] sm:$0xff]
    %v537 = vld [vmem:[#allocation3 + $0x6f8] sm:$0xff]
    %v538 = vld [vmem:[#allocation3 + $0x7f8] sm:$0xff]
    %v539 = vadd.f32 %v523, %v531
    %v540 = vadd.f32 %v524, %v532
    %v541 = vadd.f32 %v525, %v533
    %v542 = vadd.f32 %v526, %v534
    %v543 = vadd.f32 %v527, %v535
    %v544 = vadd.f32 %v528, %v536
    %v545 = vadd.f32 %v529, %v537
    %v546 = vadd.f32 %v530, %v538
    %547 = vadd.xlane.f32.xlu0 %v539
    %v548 = vpop.xlane.xlu0 %547
    %549 = vadd.xlane.f32.xlu0 %v540
    %v550 = vpop.xlane.xlu0 %549
    %551 = vadd.xlane.f32.xlu0 %v541
    %v552 = vpop.xlane.xlu0 %551
    %553 = vadd.xlane.f32.xlu0 %v542
    %v554 = vpop.xlane.xlu0 %553
    %555 = vadd.xlane.f32.xlu0 %v543
    %v556 = vpop.xlane.xlu0 %555
    %557 = vadd.xlane.f32.xlu0 %v544
    %v558 = vpop.xlane.xlu0 %557
    %559 = vadd.xlane.f32.xlu0 %v545
    %v560 = vpop.xlane.xlu0 %559
    %561 = vadd.xlane.f32.xlu0 %v546
    %v562 = vpop.xlane.xlu0 %561
    %v563 = vmul.f32 %v548, 0.00024414063
    %v564 = vmul.f32 %v550, 0.00024414063
    %v565 = vmul.f32 %v552, 0.00024414063
    %v566 = vmul.f32 %v554, 0.00024414063
    %v567 = vmul.f32 %v556, 0.00024414063
    %v568 = vmul.f32 %v558, 0.00024414063
    %v569 = vmul.f32 %v560, 0.00024414063
    %v570 = vmul.f32 %v562, 0.00024414063
    %v571 = vld [vmem:[%s1] sm:$0xff]
    %v572 = vld [vmem:[%s1 + $0x8] sm:$0xff]
    %v573 = vld [vmem:[%s1 + $0x10] sm:$0xff]
    %v574 = vld [vmem:[%s1 + $0x18] sm:$0xff]
    %v575 = vld [vmem:[%s2] sm:$0x1]
    %v576 = vld [vmem:[%s3] sm:$0xff]
    %v577 = vld [vmem:[%s3 + $0x8] sm:$0xff]
    %v578 = vld [vmem:[%s3 + $0x10] sm:$0xff]
    %v579 = vld [vmem:[%s3 + $0x18] sm:$0xff]
    %v580 = vld [vmem:[%s4] sm:$0xff]
    %v581 = vld [vmem:[%s4 + $0x8] sm:$0xff]
    %v582 = vld [vmem:[%s4 + $0x10] sm:$0xff]
    %v583 = vld [vmem:[%s4 + $0x18] sm:$0xff]
    %v584 = vmul.f32 %v571, %v563
    %v585 = vmul.f32 %v572, %v564
    %v586 = vmul.f32 %v573, %v565
    %v587 = vmul.f32 %v574, %v566
    %vm588 = vcmask 64512
    %v589 = vsel %vm588, %v584, 0.0
    %v590 = vsel %vm588, %v585, 0.0
    %v591 = vadd.f32 %v589, %v590
    %v592 = vsel %vm588, %v586, 0.0
    %v593 = vadd.f32 %v591, %v592
    %v594 = vsel %vm588, %v587, 0.0
    %v595 = vadd.f32 %v593, %v594
    %v596 = vrot.slane %v595, 4
    %v597 = vadd.f32 %v595, %v596
    %v598 = vrot.slane %v597, 2
    %v599 = vadd.f32 %v597, %v598
    %v600 = vrot.slane %v599, 1
    %v601 = vadd.f32 %v599, %v600
    %v602 = vadd.f32 %v601, %v575
    %v603 = vmax.f32 %v602, 0.0
    %v604 = vlaneseq
    %v605 = vshrl.u32 %v604, 7
    %v606 = vsub.s32 0, %v605
    %v607 = vrot.slane %v603, %v606
    %v608 = vmul.f32 %v576, %v607
    %v609 = vmul.f32 %v577, %v607
    %v610 = vmul.f32 %v578, %v607
    %v611 = vmul.f32 %v579, %v607
    %v612 = vsel %vm588, %v608, 0.0
    %613 = vadd.xlane.f32.xlu0 %v612
    %v614 = vpop.xlane.xlu0 %613
    %v615 = vsel %vm588, %v609, 0.0
    %616 = vadd.xlane.f32.xlu0 %v615
    %v617 = vpop.xlane.xlu0 %616
    %v618 = vsel %vm588, %v610, 0.0
    %619 = vadd.xlane.f32.xlu0 %v618
    %v620 = vpop.xlane.xlu0 %619
    %v621 = vsel %vm588, %v611, 0.0
    %622 = vadd.xlane.f32.xlu0 %v621
    %v623 = vpop.xlane.xlu0 %622
    %v624 = vadd.f32 %v614, %v580
    %v625 = vadd.f32 %v617, %v581
    %v626 = vadd.f32 %v620, %v582
    %v627 = vadd.f32 %v623, %v583
    %v628 = vxor.u32 %v624, 2147483648
    %v629 = vxor.u32 %v625, 2147483648
    %v630 = vxor.u32 %v626, 2147483648
    %v631 = vxor.u32 %v627, 2147483648
    %v632 = vmul.f32 %v628, 1.442695
    %v633 = vpow.pop %v632
    %v634 = vmul.f32 %v629, 1.442695
    %v635 = vpow.pop %v634
    %v636 = vmul.f32 %v630, 1.442695
    %v637 = vpow.pop %v636
    %v638 = vmul.f32 %v631, 1.442695
    %v639 = vpow.pop %v638
    %v640 = vadd.f32 %v633, 1.0
    %v641 = vadd.f32 %v635, 1.0
    %v642 = vadd.f32 %v637, 1.0
    %v643 = vadd.f32 %v639, 1.0
    %v644 = vrcp.pop %v640
    %v645 = vmul.f32 1.0, %v644
    %v646 = vrcp.pop %v641
    %v647 = vmul.f32 1.0, %v646
    %v648 = vrcp.pop %v642
    %v649 = vmul.f32 1.0, %v648
    %v650 = vrcp.pop %v643
    %v651 = vmul.f32 1.0, %v650
    %653 = vset.pattern.permute.xlu0 0
    %654 = vperm.xlu0 %653, %v645
    %v655 = vpop.permute.xlu0 %654
    %658 = vset.pattern.permute.xlu0 0
    %659 = vperm.xlu0 %658, %v647
    %v660 = vpop.permute.xlu0 %659
    %663 = vset.pattern.permute.xlu0 0
    %664 = vperm.xlu0 %663, %v649
    %v665 = vpop.permute.xlu0 %664
    %668 = vset.pattern.permute.xlu0 0
    %669 = vperm.xlu0 %668, %v651
    %v670 = vpop.permute.xlu0 %669
    %672 = vst [vmem:[#allocation2] sm:$0xff] %v655
    %673 = vst [vmem:[#allocation2 + $0x8] sm:$0xff] %v660
    %674 = vst [vmem:[#allocation2 + $0x10] sm:$0xff] %v665
    %675 = vst [vmem:[#allocation2 + $0x18] sm:$0xff] %v670
    %v676 = vmul.f32 %v571, %v567
    %v677 = vmul.f32 %v572, %v568
    %v678 = vmul.f32 %v573, %v569
    %v679 = vmul.f32 %v574, %v570
    %v680 = vsel %vm588, %v676, 0.0
    %v681 = vsel %vm588, %v677, 0.0
    %v682 = vadd.f32 %v680, %v681
    %v683 = vsel %vm588, %v678, 0.0
    %v684 = vadd.f32 %v682, %v683
    %v685 = vsel %vm588, %v679, 0.0
    %v686 = vadd.f32 %v684, %v685
    %v687 = vrot.slane %v686, 4
    %v688 = vadd.f32 %v686, %v687
    %v689 = vrot.slane %v688, 2
    %v690 = vadd.f32 %v688, %v689
    %v691 = vrot.slane %v690, 1
    %v692 = vadd.f32 %v690, %v691
    %v693 = vadd.f32 %v692, %v575
    %v694 = vmax.f32 %v693, 0.0
    %v695 = vlaneseq
    %v696 = vshrl.u32 %v695, 7
    %v697 = vsub.s32 0, %v696
    %v698 = vrot.slane %v694, %v697
    %v699 = vmul.f32 %v576, %v698
    %v700 = vmul.f32 %v577, %v698
    %v701 = vmul.f32 %v578, %v698
    %v702 = vmul.f32 %v579, %v698
    %v703 = vsel %vm588, %v699, 0.0
    %704 = vadd.xlane.f32.xlu0 %v703
    %v705 = vpop.xlane.xlu0 %704
    %v706 = vsel %vm588, %v700, 0.0
    %707 = vadd.xlane.f32.xlu0 %v706
    %v708 = vpop.xlane.xlu0 %707
    %v709 = vsel %vm588, %v701, 0.0
    %710 = vadd.xlane.f32.xlu0 %v709
    %v711 = vpop.xlane.xlu0 %710
    %v712 = vsel %vm588, %v702, 0.0
    %713 = vadd.xlane.f32.xlu0 %v712
    %v714 = vpop.xlane.xlu0 %713
    %v715 = vadd.f32 %v705, %v580
    %v716 = vadd.f32 %v708, %v581
    %v717 = vadd.f32 %v711, %v582
    %v718 = vadd.f32 %v714, %v583
    %v719 = vxor.u32 %v715, 2147483648
    %v720 = vxor.u32 %v716, 2147483648
    %v721 = vxor.u32 %v717, 2147483648
    %v722 = vxor.u32 %v718, 2147483648
    %v723 = vmul.f32 %v719, 1.442695
    %v724 = vpow.pop %v723
    %v725 = vmul.f32 %v720, 1.442695
    %v726 = vpow.pop %v725
    %v727 = vmul.f32 %v721, 1.442695
    %v728 = vpow.pop %v727
    %v729 = vmul.f32 %v722, 1.442695
    %v730 = vpow.pop %v729
    %v731 = vadd.f32 %v724, 1.0
    %v732 = vadd.f32 %v726, 1.0
    %v733 = vadd.f32 %v728, 1.0
    %v734 = vadd.f32 %v730, 1.0
    %v735 = vrcp.pop %v731
    %v736 = vmul.f32 1.0, %v735
    %v737 = vrcp.pop %v732
    %v738 = vmul.f32 1.0, %v737
    %v739 = vrcp.pop %v733
    %v740 = vmul.f32 1.0, %v739
    %v741 = vrcp.pop %v734
    %v742 = vmul.f32 1.0, %v741
    %744 = vset.pattern.permute.xlu0 0
    %745 = vperm.xlu0 %744, %v736
    %v746 = vpop.permute.xlu0 %745
    %749 = vset.pattern.permute.xlu0 0
    %750 = vperm.xlu0 %749, %v738
    %v751 = vpop.permute.xlu0 %750
    %754 = vset.pattern.permute.xlu0 0
    %755 = vperm.xlu0 %754, %v740
    %v756 = vpop.permute.xlu0 %755
    %759 = vset.pattern.permute.xlu0 0
    %760 = vperm.xlu0 %759, %v742
    %v761 = vpop.permute.xlu0 %760
    %763 = vst [vmem:[#allocation2 + $0x20] sm:$0xff] %v746
    %764 = vst [vmem:[#allocation2 + $0x28] sm:$0xff] %v751
    %765 = vst [vmem:[#allocation2 + $0x30] sm:$0xff] %v756
    %766 = vst [vmem:[#allocation2 + $0x38] sm:$0xff] %v761
    %v767 = vld [vmem:[#allocation2] sm:$0xff]
    %v768 = vld [vmem:[#allocation2 + $0x8] sm:$0xff]
    %v769 = vld [vmem:[#allocation2 + $0x10] sm:$0xff]
    %v770 = vld [vmem:[#allocation2 + $0x18] sm:$0xff]
    %v771 = vld [vmem:[#allocation2 + $0x20] sm:$0xff]
    %v772 = vld [vmem:[#allocation2 + $0x28] sm:$0xff]
    %v773 = vld [vmem:[#allocation2 + $0x30] sm:$0xff]
    %v774 = vld [vmem:[#allocation2 + $0x38] sm:$0xff]
    %v775 = vld [vmem:[#allocation3] sm:$0xff]
    %v776 = vld [vmem:[#allocation3 + $0x100] sm:$0xff]
    %v777 = vld [vmem:[#allocation3 + $0x200] sm:$0xff]
    %v778 = vld [vmem:[#allocation3 + $0x300] sm:$0xff]
    %v779 = vld [vmem:[#allocation3 + $0x400] sm:$0xff]
    %v780 = vld [vmem:[#allocation3 + $0x500] sm:$0xff]
    %v781 = vld [vmem:[#allocation3 + $0x600] sm:$0xff]
    %v782 = vld [vmem:[#allocation3 + $0x700] sm:$0xff]
    %v783 = vmul.f32 %v775, %v767
    %v784 = vmul.f32 %v776, %v768
    %v785 = vmul.f32 %v777, %v769
    %v786 = vmul.f32 %v778, %v770
    %v787 = vmul.f32 %v779, %v771
    %v788 = vmul.f32 %v780, %v772
    %v789 = vmul.f32 %v781, %v773
    %v790 = vmul.f32 %v782, %v774
    %791 = vst [vmem:[#allocation6] sm:$0xff] %v783
    %792 = vst [vmem:[#allocation6 + $0x100] sm:$0xff] %v784
    %793 = vst [vmem:[#allocation6 + $0x200] sm:$0xff] %v785
    %794 = vst [vmem:[#allocation6 + $0x300] sm:$0xff] %v786
    %795 = vst [vmem:[#allocation6 + $0x400] sm:$0xff] %v787
    %796 = vst [vmem:[#allocation6 + $0x500] sm:$0xff] %v788
    %797 = vst [vmem:[#allocation6 + $0x600] sm:$0xff] %v789
    %798 = vst [vmem:[#allocation6 + $0x700] sm:$0xff] %v790
    %v799 = vld [vmem:[#allocation3 + $0x8] sm:$0xff]
    %v800 = vld [vmem:[#allocation3 + $0x108] sm:$0xff]
    %v801 = vld [vmem:[#allocation3 + $0x208] sm:$0xff]
    %v802 = vld [vmem:[#allocation3 + $0x308] sm:$0xff]
    %v803 = vld [vmem:[#allocation3 + $0x408] sm:$0xff]
    %v804 = vld [vmem:[#allocation3 + $0x508] sm:$0xff]
    %v805 = vld [vmem:[#allocation3 + $0x608] sm:$0xff]
    %v806 = vld [vmem:[#allocation3 + $0x708] sm:$0xff]
    %v807 = vmul.f32 %v799, %v767
    %v808 = vmul.f32 %v800, %v768
    %v809 = vmul.f32 %v801, %v769
    %v810 = vmul.f32 %v802, %v770
    %v811 = vmul.f32 %v803, %v771
    %v812 = vmul.f32 %v804, %v772
    %v813 = vmul.f32 %v805, %v773
    %v814 = vmul.f32 %v806, %v774
    %815 = vst [vmem:[#allocation6 + $0x8] sm:$0xff] %v807
    %816 = vst [vmem:[#allocation6 + $0x108] sm:$0xff] %v808
    %817 = vst [vmem:[#allocation6 + $0x208] sm:$0xff] %v809
    %818 = vst [vmem:[#allocation6 + $0x308] sm:$0xff] %v810
    %819 = vst [vmem:[#allocation6 + $0x408] sm:$0xff] %v811
    %820 = vst [vmem:[#allocation6 + $0x508] sm:$0xff] %v812
    %821 = vst [vmem:[#allocation6 + $0x608] sm:$0xff] %v813
    %822 = vst [vmem:[#allocation6 + $0x708] sm:$0xff] %v814
    %v823 = vld [vmem:[#allocation3 + $0x10] sm:$0xff]
    %v824 = vld [vmem:[#allocation3 + $0x110] sm:$0xff]
    %v825 = vld [vmem:[#allocation3 + $0x210] sm:$0xff]
    %v826 = vld [vmem:[#allocation3 + $0x310] sm:$0xff]
    %v827 = vld [vmem:[#allocation3 + $0x410] sm:$0xff]
    %v828 = vld [vmem:[#allocation3 + $0x510] sm:$0xff]
    %v829 = vld [vmem:[#allocation3 + $0x610] sm:$0xff]
    %v830 = vld [vmem:[#allocation3 + $0x710] sm:$0xff]
    %v831 = vmul.f32 %v823, %v767
    %v832 = vmul.f32 %v824, %v768
    %v833 = vmul.f32 %v825, %v769
    %v834 = vmul.f32 %v826, %v770
    %v835 = vmul.f32 %v827, %v771
    %v836 = vmul.f32 %v828, %v772
    %v837 = vmul.f32 %v829, %v773
    %v838 = vmul.f32 %v830, %v774
    %839 = vst [vmem:[#allocation6 + $0x10] sm:$0xff] %v831
    %840 = vst [vmem:[#allocation6 + $0x110] sm:$0xff] %v832
    %841 = vst [vmem:[#allocation6 + $0x210] sm:$0xff] %v833
    %842 = vst [vmem:[#allocation6 + $0x310] sm:$0xff] %v834
    %843 = vst [vmem:[#allocation6 + $0x410] sm:$0xff] %v835
    %844 = vst [vmem:[#allocation6 + $0x510] sm:$0xff] %v836
    %845 = vst [vmem:[#allocation6 + $0x610] sm:$0xff] %v837
    %846 = vst [vmem:[#allocation6 + $0x710] sm:$0xff] %v838
    %v847 = vld [vmem:[#allocation3 + $0x18] sm:$0xff]
    %v848 = vld [vmem:[#allocation3 + $0x118] sm:$0xff]
    %v849 = vld [vmem:[#allocation3 + $0x218] sm:$0xff]
    %v850 = vld [vmem:[#allocation3 + $0x318] sm:$0xff]
    %v851 = vld [vmem:[#allocation3 + $0x418] sm:$0xff]
    %v852 = vld [vmem:[#allocation3 + $0x518] sm:$0xff]
    %v853 = vld [vmem:[#allocation3 + $0x618] sm:$0xff]
    %v854 = vld [vmem:[#allocation3 + $0x718] sm:$0xff]
    %v855 = vmul.f32 %v847, %v767
    %v856 = vmul.f32 %v848, %v768
    %v857 = vmul.f32 %v849, %v769
    %v858 = vmul.f32 %v850, %v770
    %v859 = vmul.f32 %v851, %v771
    %v860 = vmul.f32 %v852, %v772
    %v861 = vmul.f32 %v853, %v773
    %v862 = vmul.f32 %v854, %v774
    %863 = vst [vmem:[#allocation6 + $0x18] sm:$0xff] %v855
    %864 = vst [vmem:[#allocation6 + $0x118] sm:$0xff] %v856
    %865 = vst [vmem:[#allocation6 + $0x218] sm:$0xff] %v857
    %866 = vst [vmem:[#allocation6 + $0x318] sm:$0xff] %v858
    %867 = vst [vmem:[#allocation6 + $0x418] sm:$0xff] %v859
    %868 = vst [vmem:[#allocation6 + $0x518] sm:$0xff] %v860
    %869 = vst [vmem:[#allocation6 + $0x618] sm:$0xff] %v861
    %870 = vst [vmem:[#allocation6 + $0x718] sm:$0xff] %v862
    %v871 = vld [vmem:[#allocation3 + $0x20] sm:$0xff]
    %v872 = vld [vmem:[#allocation3 + $0x120] sm:$0xff]
    %v873 = vld [vmem:[#allocation3 + $0x220] sm:$0xff]
    %v874 = vld [vmem:[#allocation3 + $0x320] sm:$0xff]
    %v875 = vld [vmem:[#allocation3 + $0x420] sm:$0xff]
    %v876 = vld [vmem:[#allocation3 + $0x520] sm:$0xff]
    %v877 = vld [vmem:[#allocation3 + $0x620] sm:$0xff]
    %v878 = vld [vmem:[#allocation3 + $0x720] sm:$0xff]
    %v879 = vmul.f32 %v871, %v767
    %v880 = vmul.f32 %v872, %v768
    %v881 = vmul.f32 %v873, %v769
    %v882 = vmul.f32 %v874, %v770
    %v883 = vmul.f32 %v875, %v771
    %v884 = vmul.f32 %v876, %v772
    %v885 = vmul.f32 %v877, %v773
    %v886 = vmul.f32 %v878, %v774
    %887 = vst [vmem:[#allocation6 + $0x20] sm:$0xff] %v879
    %888 = vst [vmem:[#allocation6 + $0x120] sm:$0xff] %v880
    %889 = vst [vmem:[#allocation6 + $0x220] sm:$0xff] %v881
    %890 = vst [vmem:[#allocation6 + $0x320] sm:$0xff] %v882
    %891 = vst [vmem:[#allocation6 + $0x420] sm:$0xff] %v883
    %892 = vst [vmem:[#allocation6 + $0x520] sm:$0xff] %v884
    %893 = vst [vmem:[#allocation6 + $0x620] sm:$0xff] %v885
    %894 = vst [vmem:[#allocation6 + $0x720] sm:$0xff] %v886
    %v895 = vld [vmem:[#allocation3 + $0x28] sm:$0xff]
    %v896 = vld [vmem:[#allocation3 + $0x128] sm:$0xff]
    %v897 = vld [vmem:[#allocation3 + $0x228] sm:$0xff]
    %v898 = vld [vmem:[#allocation3 + $0x328] sm:$0xff]
    %v899 = vld [vmem:[#allocation3 + $0x428] sm:$0xff]
    %v900 = vld [vmem:[#allocation3 + $0x528] sm:$0xff]
    %v901 = vld [vmem:[#allocation3 + $0x628] sm:$0xff]
    %v902 = vld [vmem:[#allocation3 + $0x728] sm:$0xff]
    %v903 = vmul.f32 %v895, %v767
    %v904 = vmul.f32 %v896, %v768
    %v905 = vmul.f32 %v897, %v769
    %v906 = vmul.f32 %v898, %v770
    %v907 = vmul.f32 %v899, %v771
    %v908 = vmul.f32 %v900, %v772
    %v909 = vmul.f32 %v901, %v773
    %v910 = vmul.f32 %v902, %v774
    %911 = vst [vmem:[#allocation6 + $0x28] sm:$0xff] %v903
    %912 = vst [vmem:[#allocation6 + $0x128] sm:$0xff] %v904
    %913 = vst [vmem:[#allocation6 + $0x228] sm:$0xff] %v905
    %914 = vst [vmem:[#allocation6 + $0x328] sm:$0xff] %v906
    %915 = vst [vmem:[#allocation6 + $0x428] sm:$0xff] %v907
    %916 = vst [vmem:[#allocation6 + $0x528] sm:$0xff] %v908
    %917 = vst [vmem:[#allocation6 + $0x628] sm:$0xff] %v909
    %918 = vst [vmem:[#allocation6 + $0x728] sm:$0xff] %v910
    %v919 = vld [vmem:[#allocation3 + $0x30] sm:$0xff]
    %v920 = vld [vmem:[#allocation3 + $0x130] sm:$0xff]
    %v921 = vld [vmem:[#allocation3 + $0x230] sm:$0xff]
    %v922 = vld [vmem:[#allocation3 + $0x330] sm:$0xff]
    %v923 = vld [vmem:[#allocation3 + $0x430] sm:$0xff]
    %v924 = vld [vmem:[#allocation3 + $0x530] sm:$0xff]
    %v925 = vld [vmem:[#allocation3 + $0x630] sm:$0xff]
    %v926 = vld [vmem:[#allocation3 + $0x730] sm:$0xff]
    %v927 = vmul.f32 %v919, %v767
    %v928 = vmul.f32 %v920, %v768
    %v929 = vmul.f32 %v921, %v769
    %v930 = vmul.f32 %v922, %v770
    %v931 = vmul.f32 %v923, %v771
    %v932 = vmul.f32 %v924, %v772
    %v933 = vmul.f32 %v925, %v773
    %v934 = vmul.f32 %v926, %v774
    %935 = vst [vmem:[#allocation6 + $0x30] sm:$0xff] %v927
    %936 = vst [vmem:[#allocation6 + $0x130] sm:$0xff] %v928
    %937 = vst [vmem:[#allocation6 + $0x230] sm:$0xff] %v929
    %938 = vst [vmem:[#allocation6 + $0x330] sm:$0xff] %v930
    %939 = vst [vmem:[#allocation6 + $0x430] sm:$0xff] %v931
    %940 = vst [vmem:[#allocation6 + $0x530] sm:$0xff] %v932
    %941 = vst [vmem:[#allocation6 + $0x630] sm:$0xff] %v933
    %942 = vst [vmem:[#allocation6 + $0x730] sm:$0xff] %v934
    %v943 = vld [vmem:[#allocation3 + $0x38] sm:$0xff]
    %v944 = vld [vmem:[#allocation3 + $0x138] sm:$0xff]
    %v945 = vld [vmem:[#allocation3 + $0x238] sm:$0xff]
    %v946 = vld [vmem:[#allocation3 + $0x338] sm:$0xff]
    %v947 = vld [vmem:[#allocation3 + $0x438] sm:$0xff]
    %v948 = vld [vmem:[#allocation3 + $0x538] sm:$0xff]
    %v949 = vld [vmem:[#allocation3 + $0x638] sm:$0xff]
    %v950 = vld [vmem:[#allocation3 + $0x738] sm:$0xff]
    %v951 = vmul.f32 %v943, %v767
    %v952 = vmul.f32 %v944, %v768
    %v953 = vmul.f32 %v945, %v769
    %v954 = vmul.f32 %v946, %v770
    %v955 = vmul.f32 %v947, %v771
    %v956 = vmul.f32 %v948, %v772
    %v957 = vmul.f32 %v949, %v773
    %v958 = vmul.f32 %v950, %v774
    %959 = vst [vmem:[#allocation6 + $0x38] sm:$0xff] %v951
    %960 = vst [vmem:[#allocation6 + $0x138] sm:$0xff] %v952
    %961 = vst [vmem:[#allocation6 + $0x238] sm:$0xff] %v953
    %962 = vst [vmem:[#allocation6 + $0x338] sm:$0xff] %v954
    %963 = vst [vmem:[#allocation6 + $0x438] sm:$0xff] %v955
    %964 = vst [vmem:[#allocation6 + $0x538] sm:$0xff] %v956
    %965 = vst [vmem:[#allocation6 + $0x638] sm:$0xff] %v957
    %966 = vst [vmem:[#allocation6 + $0x738] sm:$0xff] %v958
    %v967 = vld [vmem:[#allocation3 + $0x40] sm:$0xff]
    %v968 = vld [vmem:[#allocation3 + $0x140] sm:$0xff]
    %v969 = vld [vmem:[#allocation3 + $0x240] sm:$0xff]
    %v970 = vld [vmem:[#allocation3 + $0x340] sm:$0xff]
    %v971 = vld [vmem:[#allocation3 + $0x440] sm:$0xff]
    %v972 = vld [vmem:[#allocation3 + $0x540] sm:$0xff]
    %v973 = vld [vmem:[#allocation3 + $0x640] sm:$0xff]
    %v974 = vld [vmem:[#allocation3 + $0x740] sm:$0xff]
    %v975 = vmul.f32 %v967, %v767
    %v976 = vmul.f32 %v968, %v768
    %v977 = vmul.f32 %v969, %v769
    %v978 = vmul.f32 %v970, %v770
    %v979 = vmul.f32 %v971, %v771
    %v980 = vmul.f32 %v972, %v772
    %v981 = vmul.f32 %v973, %v773
    %v982 = vmul.f32 %v974, %v774
    %983 = vst [vmem:[#allocation6 + $0x40] sm:$0xff] %v975
    %984 = vst [vmem:[#allocation6 + $0x140] sm:$0xff] %v976
    %985 = vst [vmem:[#allocation6 + $0x240] sm:$0xff] %v977
    %986 = vst [vmem:[#allocation6 + $0x340] sm:$0xff] %v978
    %987 = vst [vmem:[#allocation6 + $0x440] sm:$0xff] %v979
    %988 = vst [vmem:[#allocation6 + $0x540] sm:$0xff] %v980
    %989 = vst [vmem:[#allocation6 + $0x640] sm:$0xff] %v981
    %990 = vst [vmem:[#allocation6 + $0x740] sm:$0xff] %v982
    %v991 = vld [vmem:[#allocation3 + $0x48] sm:$0xff]
    %v992 = vld [vmem:[#allocation3 + $0x148] sm:$0xff]
    %v993 = vld [vmem:[#allocation3 + $0x248] sm:$0xff]
    %v994 = vld [vmem:[#allocation3 + $0x348] sm:$0xff]
    %v995 = vld [vmem:[#allocation3 + $0x448] sm:$0xff]
    %v996 = vld [vmem:[#allocation3 + $0x548] sm:$0xff]
    %v997 = vld [vmem:[#allocation3 + $0x648] sm:$0xff]
    %v998 = vld [vmem:[#allocation3 + $0x748] sm:$0xff]
    %v999 = vmul.f32 %v991, %v767
    %v1000 = vmul.f32 %v992, %v768
    %v1001 = vmul.f32 %v993, %v769
    %v1002 = vmul.f32 %v994, %v770
    %v1003 = vmul.f32 %v995, %v771
    %v1004 = vmul.f32 %v996, %v772
    %v1005 = vmul.f32 %v997, %v773
    %v1006 = vmul.f32 %v998, %v774
    %1007 = vst [vmem:[#allocation6 + $0x48] sm:$0xff] %v999
    %1008 = vst [vmem:[#allocation6 + $0x148] sm:$0xff] %v1000
    %1009 = vst [vmem:[#allocation6 + $0x248] sm:$0xff] %v1001
    %1010 = vst [vmem:[#allocation6 + $0x348] sm:$0xff] %v1002
    %1011 = vst [vmem:[#allocation6 + $0x448] sm:$0xff] %v1003
    %1012 = vst [vmem:[#allocation6 + $0x548] sm:$0xff] %v1004
    %1013 = vst [vmem:[#allocation6 + $0x648] sm:$0xff] %v1005
    %1014 = vst [vmem:[#allocation6 + $0x748] sm:$0xff] %v1006
    %v1015 = vld [vmem:[#allocation3 + $0x50] sm:$0xff]
    %v1016 = vld [vmem:[#allocation3 + $0x150] sm:$0xff]
    %v1017 = vld [vmem:[#allocation3 + $0x250] sm:$0xff]
    %v1018 = vld [vmem:[#allocation3 + $0x350] sm:$0xff]
    %v1019 = vld [vmem:[#allocation3 + $0x450] sm:$0xff]
    %v1020 = vld [vmem:[#allocation3 + $0x550] sm:$0xff]
    %v1021 = vld [vmem:[#allocation3 + $0x650] sm:$0xff]
    %v1022 = vld [vmem:[#allocation3 + $0x750] sm:$0xff]
    %v1023 = vmul.f32 %v1015, %v767
    %v1024 = vmul.f32 %v1016, %v768
    %v1025 = vmul.f32 %v1017, %v769
    %v1026 = vmul.f32 %v1018, %v770
    %v1027 = vmul.f32 %v1019, %v771
    %v1028 = vmul.f32 %v1020, %v772
    %v1029 = vmul.f32 %v1021, %v773
    %v1030 = vmul.f32 %v1022, %v774
    %1031 = vst [vmem:[#allocation6 + $0x50] sm:$0xff] %v1023
    %1032 = vst [vmem:[#allocation6 + $0x150] sm:$0xff] %v1024
    %1033 = vst [vmem:[#allocation6 + $0x250] sm:$0xff] %v1025
    %1034 = vst [vmem:[#allocation6 + $0x350] sm:$0xff] %v1026
    %1035 = vst [vmem:[#allocation6 + $0x450] sm:$0xff] %v1027
    %1036 = vst [vmem:[#allocation6 + $0x550] sm:$0xff] %v1028
    %1037 = vst [vmem:[#allocation6 + $0x650] sm:$0xff] %v1029
    %1038 = vst [vmem:[#allocation6 + $0x750] sm:$0xff] %v1030
    %v1039 = vld [vmem:[#allocation3 + $0x58] sm:$0xff]
    %v1040 = vld [vmem:[#allocation3 + $0x158] sm:$0xff]
    %v1041 = vld [vmem:[#allocation3 + $0x258] sm:$0xff]
    %v1042 = vld [vmem:[#allocation3 + $0x358] sm:$0xff]
    %v1043 = vld [vmem:[#allocation3 + $0x458] sm:$0xff]
    %v1044 = vld [vmem:[#allocation3 + $0x558] sm:$0xff]
    %v1045 = vld [vmem:[#allocation3 + $0x658] sm:$0xff]
    %v1046 = vld [vmem:[#allocation3 + $0x758] sm:$0xff]
    %v1047 = vmul.f32 %v1039, %v767
    %v1048 = vmul.f32 %v1040, %v768
    %v1049 = vmul.f32 %v1041, %v769
    %v1050 = vmul.f32 %v1042, %v770
    %v1051 = vmul.f32 %v1043, %v771
    %v1052 = vmul.f32 %v1044, %v772
    %v1053 = vmul.f32 %v1045, %v773
    %v1054 = vmul.f32 %v1046, %v774
    %1055 = vst [vmem:[#allocation6 + $0x58] sm:$0xff] %v1047
    %1056 = vst [vmem:[#allocation6 + $0x158] sm:$0xff] %v1048
    %1057 = vst [vmem:[#allocation6 + $0x258] sm:$0xff] %v1049
    %1058 = vst [vmem:[#allocation6 + $0x358] sm:$0xff] %v1050
    %1059 = vst [vmem:[#allocation6 + $0x458] sm:$0xff] %v1051
    %1060 = vst [vmem:[#allocation6 + $0x558] sm:$0xff] %v1052
    %1061 = vst [vmem:[#allocation6 + $0x658] sm:$0xff] %v1053
    %1062 = vst [vmem:[#allocation6 + $0x758] sm:$0xff] %v1054
    %v1063 = vld [vmem:[#allocation3 + $0x60] sm:$0xff]
    %v1064 = vld [vmem:[#allocation3 + $0x160] sm:$0xff]
    %v1065 = vld [vmem:[#allocation3 + $0x260] sm:$0xff]
    %v1066 = vld [vmem:[#allocation3 + $0x360] sm:$0xff]
    %v1067 = vld [vmem:[#allocation3 + $0x460] sm:$0xff]
    %v1068 = vld [vmem:[#allocation3 + $0x560] sm:$0xff]
    %v1069 = vld [vmem:[#allocation3 + $0x660] sm:$0xff]
    %v1070 = vld [vmem:[#allocation3 + $0x760] sm:$0xff]
    %v1071 = vmul.f32 %v1063, %v767
    %v1072 = vmul.f32 %v1064, %v768
    %v1073 = vmul.f32 %v1065, %v769
    %v1074 = vmul.f32 %v1066, %v770
    %v1075 = vmul.f32 %v1067, %v771
    %v1076 = vmul.f32 %v1068, %v772
    %v1077 = vmul.f32 %v1069, %v773
    %v1078 = vmul.f32 %v1070, %v774
    %1079 = vst [vmem:[#allocation6 + $0x60] sm:$0xff] %v1071
    %1080 = vst [vmem:[#allocation6 + $0x160] sm:$0xff] %v1072
    %1081 = vst [vmem:[#allocation6 + $0x260] sm:$0xff] %v1073
    %1082 = vst [vmem:[#allocation6 + $0x360] sm:$0xff] %v1074
    %1083 = vst [vmem:[#allocation6 + $0x460] sm:$0xff] %v1075
    %1084 = vst [vmem:[#allocation6 + $0x560] sm:$0xff] %v1076
    %1085 = vst [vmem:[#allocation6 + $0x660] sm:$0xff] %v1077
    %1086 = vst [vmem:[#allocation6 + $0x760] sm:$0xff] %v1078
    %v1087 = vld [vmem:[#allocation3 + $0x68] sm:$0xff]
    %v1088 = vld [vmem:[#allocation3 + $0x168] sm:$0xff]
    %v1089 = vld [vmem:[#allocation3 + $0x268] sm:$0xff]
    %v1090 = vld [vmem:[#allocation3 + $0x368] sm:$0xff]
    %v1091 = vld [vmem:[#allocation3 + $0x468] sm:$0xff]
    %v1092 = vld [vmem:[#allocation3 + $0x568] sm:$0xff]
    %v1093 = vld [vmem:[#allocation3 + $0x668] sm:$0xff]
    %v1094 = vld [vmem:[#allocation3 + $0x768] sm:$0xff]
    %v1095 = vmul.f32 %v1087, %v767
    %v1096 = vmul.f32 %v1088, %v768
    %v1097 = vmul.f32 %v1089, %v769
    %v1098 = vmul.f32 %v1090, %v770
    %v1099 = vmul.f32 %v1091, %v771
    %v1100 = vmul.f32 %v1092, %v772
    %v1101 = vmul.f32 %v1093, %v773
    %v1102 = vmul.f32 %v1094, %v774
    %1103 = vst [vmem:[#allocation6 + $0x68] sm:$0xff] %v1095
    %1104 = vst [vmem:[#allocation6 + $0x168] sm:$0xff] %v1096
    %1105 = vst [vmem:[#allocation6 + $0x268] sm:$0xff] %v1097
    %1106 = vst [vmem:[#allocation6 + $0x368] sm:$0xff] %v1098
    %1107 = vst [vmem:[#allocation6 + $0x468] sm:$0xff] %v1099
    %1108 = vst [vmem:[#allocation6 + $0x568] sm:$0xff] %v1100
    %1109 = vst [vmem:[#allocation6 + $0x668] sm:$0xff] %v1101
    %1110 = vst [vmem:[#allocation6 + $0x768] sm:$0xff] %v1102
    %v1111 = vld [vmem:[#allocation3 + $0x70] sm:$0xff]
    %v1112 = vld [vmem:[#allocation3 + $0x170] sm:$0xff]
    %v1113 = vld [vmem:[#allocation3 + $0x270] sm:$0xff]
    %v1114 = vld [vmem:[#allocation3 + $0x370] sm:$0xff]
    %v1115 = vld [vmem:[#allocation3 + $0x470] sm:$0xff]
    %v1116 = vld [vmem:[#allocation3 + $0x570] sm:$0xff]
    %v1117 = vld [vmem:[#allocation3 + $0x670] sm:$0xff]
    %v1118 = vld [vmem:[#allocation3 + $0x770] sm:$0xff]
    %v1119 = vmul.f32 %v1111, %v767
    %v1120 = vmul.f32 %v1112, %v768
    %v1121 = vmul.f32 %v1113, %v769
    %v1122 = vmul.f32 %v1114, %v770
    %v1123 = vmul.f32 %v1115, %v771
    %v1124 = vmul.f32 %v1116, %v772
    %v1125 = vmul.f32 %v1117, %v773
    %v1126 = vmul.f32 %v1118, %v774
    %1127 = vst [vmem:[#allocation6 + $0x70] sm:$0xff] %v1119
    %1128 = vst [vmem:[#allocation6 + $0x170] sm:$0xff] %v1120
    %1129 = vst [vmem:[#allocation6 + $0x270] sm:$0xff] %v1121
    %1130 = vst [vmem:[#allocation6 + $0x370] sm:$0xff] %v1122
    %1131 = vst [vmem:[#allocation6 + $0x470] sm:$0xff] %v1123
    %1132 = vst [vmem:[#allocation6 + $0x570] sm:$0xff] %v1124
    %1133 = vst [vmem:[#allocation6 + $0x670] sm:$0xff] %v1125
    %1134 = vst [vmem:[#allocation6 + $0x770] sm:$0xff] %v1126
    %v1135 = vld [vmem:[#allocation3 + $0x78] sm:$0xff]
    %v1136 = vld [vmem:[#allocation3 + $0x178] sm:$0xff]
    %v1137 = vld [vmem:[#allocation3 + $0x278] sm:$0xff]
    %v1138 = vld [vmem:[#allocation3 + $0x378] sm:$0xff]
    %v1139 = vld [vmem:[#allocation3 + $0x478] sm:$0xff]
    %v1140 = vld [vmem:[#allocation3 + $0x578] sm:$0xff]
    %v1141 = vld [vmem:[#allocation3 + $0x678] sm:$0xff]
    %v1142 = vld [vmem:[#allocation3 + $0x778] sm:$0xff]
    %v1143 = vmul.f32 %v1135, %v767
    %v1144 = vmul.f32 %v1136, %v768
    %v1145 = vmul.f32 %v1137, %v769
    %v1146 = vmul.f32 %v1138, %v770
    %v1147 = vmul.f32 %v1139, %v771
    %v1148 = vmul.f32 %v1140, %v772
    %v1149 = vmul.f32 %v1141, %v773
    %v1150 = vmul.f32 %v1142, %v774
    %1151 = vst [vmem:[#allocation6 + $0x78] sm:$0xff] %v1143
    %1152 = vst [vmem:[#allocation6 + $0x178] sm:$0xff] %v1144
    %1153 = vst [vmem:[#allocation6 + $0x278] sm:$0xff] %v1145
    %1154 = vst [vmem:[#allocation6 + $0x378] sm:$0xff] %v1146
    %1155 = vst [vmem:[#allocation6 + $0x478] sm:$0xff] %v1147
    %1156 = vst [vmem:[#allocation6 + $0x578] sm:$0xff] %v1148
    %1157 = vst [vmem:[#allocation6 + $0x678] sm:$0xff] %v1149
    %1158 = vst [vmem:[#allocation6 + $0x778] sm:$0xff] %v1150
    %v1159 = vld [vmem:[#allocation3 + $0x80] sm:$0xff]
    %v1160 = vld [vmem:[#allocation3 + $0x180] sm:$0xff]
    %v1161 = vld [vmem:[#allocation3 + $0x280] sm:$0xff]
    %v1162 = vld [vmem:[#allocation3 + $0x380] sm:$0xff]
    %v1163 = vld [vmem:[#allocation3 + $0x480] sm:$0xff]
    %v1164 = vld [vmem:[#allocation3 + $0x580] sm:$0xff]
    %v1165 = vld [vmem:[#allocation3 + $0x680] sm:$0xff]
    %v1166 = vld [vmem:[#allocation3 + $0x780] sm:$0xff]
    %v1167 = vmul.f32 %v1159, %v767
    %v1168 = vmul.f32 %v1160, %v768
    %v1169 = vmul.f32 %v1161, %v769
    %v1170 = vmul.f32 %v1162, %v770
    %v1171 = vmul.f32 %v1163, %v771
    %v1172 = vmul.f32 %v1164, %v772
    %v1173 = vmul.f32 %v1165, %v773
    %v1174 = vmul.f32 %v1166, %v774
    %1175 = vst [vmem:[#allocation6 + $0x80] sm:$0xff] %v1167
    %1176 = vst [vmem:[#allocation6 + $0x180] sm:$0xff] %v1168
    %1177 = vst [vmem:[#allocation6 + $0x280] sm:$0xff] %v1169
    %1178 = vst [vmem:[#allocation6 + $0x380] sm:$0xff] %v1170
    %1179 = vst [vmem:[#allocation6 + $0x480] sm:$0xff] %v1171
    %1180 = vst [vmem:[#allocation6 + $0x580] sm:$0xff] %v1172
    %1181 = vst [vmem:[#allocation6 + $0x680] sm:$0xff] %v1173
    %1182 = vst [vmem:[#allocation6 + $0x780] sm:$0xff] %v1174
    %v1183 = vld [vmem:[#allocation3 + $0x88] sm:$0xff]
    %v1184 = vld [vmem:[#allocation3 + $0x188] sm:$0xff]
    %v1185 = vld [vmem:[#allocation3 + $0x288] sm:$0xff]
    %v1186 = vld [vmem:[#allocation3 + $0x388] sm:$0xff]
    %v1187 = vld [vmem:[#allocation3 + $0x488] sm:$0xff]
    %v1188 = vld [vmem:[#allocation3 + $0x588] sm:$0xff]
    %v1189 = vld [vmem:[#allocation3 + $0x688] sm:$0xff]
    %v1190 = vld [vmem:[#allocation3 + $0x788] sm:$0xff]
    %v1191 = vmul.f32 %v1183, %v767
    %v1192 = vmul.f32 %v1184, %v768
    %v1193 = vmul.f32 %v1185, %v769
    %v1194 = vmul.f32 %v1186, %v770
    %v1195 = vmul.f32 %v1187, %v771
    %v1196 = vmul.f32 %v1188, %v772
    %v1197 = vmul.f32 %v1189, %v773
    %v1198 = vmul.f32 %v1190, %v774
    %1199 = vst [vmem:[#allocation6 + $0x88] sm:$0xff] %v1191
    %1200 = vst [vmem:[#allocation6 + $0x188] sm:$0xff] %v1192
    %1201 = vst [vmem:[#allocation6 + $0x288] sm:$0xff] %v1193
    %1202 = vst [vmem:[#allocation6 + $0x388] sm:$0xff] %v1194
    %1203 = vst [vmem:[#allocation6 + $0x488] sm:$0xff] %v1195
    %1204 = vst [vmem:[#allocation6 + $0x588] sm:$0xff] %v1196
    %1205 = vst [vmem:[#allocation6 + $0x688] sm:$0xff] %v1197
    %1206 = vst [vmem:[#allocation6 + $0x788] sm:$0xff] %v1198
    %v1207 = vld [vmem:[#allocation3 + $0x90] sm:$0xff]
    %v1208 = vld [vmem:[#allocation3 + $0x190] sm:$0xff]
    %v1209 = vld [vmem:[#allocation3 + $0x290] sm:$0xff]
    %v1210 = vld [vmem:[#allocation3 + $0x390] sm:$0xff]
    %v1211 = vld [vmem:[#allocation3 + $0x490] sm:$0xff]
    %v1212 = vld [vmem:[#allocation3 + $0x590] sm:$0xff]
    %v1213 = vld [vmem:[#allocation3 + $0x690] sm:$0xff]
    %v1214 = vld [vmem:[#allocation3 + $0x790] sm:$0xff]
    %v1215 = vmul.f32 %v1207, %v767
    %v1216 = vmul.f32 %v1208, %v768
    %v1217 = vmul.f32 %v1209, %v769
    %v1218 = vmul.f32 %v1210, %v770
    %v1219 = vmul.f32 %v1211, %v771
    %v1220 = vmul.f32 %v1212, %v772
    %v1221 = vmul.f32 %v1213, %v773
    %v1222 = vmul.f32 %v1214, %v774
    %1223 = vst [vmem:[#allocation6 + $0x90] sm:$0xff] %v1215
    %1224 = vst [vmem:[#allocation6 + $0x190] sm:$0xff] %v1216
    %1225 = vst [vmem:[#allocation6 + $0x290] sm:$0xff] %v1217
    %1226 = vst [vmem:[#allocation6 + $0x390] sm:$0xff] %v1218
    %1227 = vst [vmem:[#allocation6 + $0x490] sm:$0xff] %v1219
    %1228 = vst [vmem:[#allocation6 + $0x590] sm:$0xff] %v1220
    %1229 = vst [vmem:[#allocation6 + $0x690] sm:$0xff] %v1221
    %1230 = vst [vmem:[#allocation6 + $0x790] sm:$0xff] %v1222
    %v1231 = vld [vmem:[#allocation3 + $0x98] sm:$0xff]
    %v1232 = vld [vmem:[#allocation3 + $0x198] sm:$0xff]
    %v1233 = vld [vmem:[#allocation3 + $0x298] sm:$0xff]
    %v1234 = vld [vmem:[#allocation3 + $0x398] sm:$0xff]
    %v1235 = vld [vmem:[#allocation3 + $0x498] sm:$0xff]
    %v1236 = vld [vmem:[#allocation3 + $0x598] sm:$0xff]
    %v1237 = vld [vmem:[#allocation3 + $0x698] sm:$0xff]
    %v1238 = vld [vmem:[#allocation3 + $0x798] sm:$0xff]
    %v1239 = vmul.f32 %v1231, %v767
    %v1240 = vmul.f32 %v1232, %v768
    %v1241 = vmul.f32 %v1233, %v769
    %v1242 = vmul.f32 %v1234, %v770
    %v1243 = vmul.f32 %v1235, %v771
    %v1244 = vmul.f32 %v1236, %v772
    %v1245 = vmul.f32 %v1237, %v773
    %v1246 = vmul.f32 %v1238, %v774
    %1247 = vst [vmem:[#allocation6 + $0x98] sm:$0xff] %v1239
    %1248 = vst [vmem:[#allocation6 + $0x198] sm:$0xff] %v1240
    %1249 = vst [vmem:[#allocation6 + $0x298] sm:$0xff] %v1241
    %1250 = vst [vmem:[#allocation6 + $0x398] sm:$0xff] %v1242
    %1251 = vst [vmem:[#allocation6 + $0x498] sm:$0xff] %v1243
    %1252 = vst [vmem:[#allocation6 + $0x598] sm:$0xff] %v1244
    %1253 = vst [vmem:[#allocation6 + $0x698] sm:$0xff] %v1245
    %1254 = vst [vmem:[#allocation6 + $0x798] sm:$0xff] %v1246
    %v1255 = vld [vmem:[#allocation3 + $0xa0] sm:$0xff]
    %v1256 = vld [vmem:[#allocation3 + $0x1a0] sm:$0xff]
    %v1257 = vld [vmem:[#allocation3 + $0x2a0] sm:$0xff]
    %v1258 = vld [vmem:[#allocation3 + $0x3a0] sm:$0xff]
    %v1259 = vld [vmem:[#allocation3 + $0x4a0] sm:$0xff]
    %v1260 = vld [vmem:[#allocation3 + $0x5a0] sm:$0xff]
    %v1261 = vld [vmem:[#allocation3 + $0x6a0] sm:$0xff]
    %v1262 = vld [vmem:[#allocation3 + $0x7a0] sm:$0xff]
    %v1263 = vmul.f32 %v1255, %v767
    %v1264 = vmul.f32 %v1256, %v768
    %v1265 = vmul.f32 %v1257, %v769
    %v1266 = vmul.f32 %v1258, %v770
    %v1267 = vmul.f32 %v1259, %v771
    %v1268 = vmul.f32 %v1260, %v772
    %v1269 = vmul.f32 %v1261, %v773
    %v1270 = vmul.f32 %v1262, %v774
    %1271 = vst [vmem:[#allocation6 + $0xa0] sm:$0xff] %v1263
    %1272 = vst [vmem:[#allocation6 + $0x1a0] sm:$0xff] %v1264
    %1273 = vst [vmem:[#allocation6 + $0x2a0] sm:$0xff] %v1265
    %1274 = vst [vmem:[#allocation6 + $0x3a0] sm:$0xff] %v1266
    %1275 = vst [vmem:[#allocation6 + $0x4a0] sm:$0xff] %v1267
    %1276 = vst [vmem:[#allocation6 + $0x5a0] sm:$0xff] %v1268
    %1277 = vst [vmem:[#allocation6 + $0x6a0] sm:$0xff] %v1269
    %1278 = vst [vmem:[#allocation6 + $0x7a0] sm:$0xff] %v1270
    %v1279 = vld [vmem:[#allocation3 + $0xa8] sm:$0xff]
    %v1280 = vld [vmem:[#allocation3 + $0x1a8] sm:$0xff]
    %v1281 = vld [vmem:[#allocation3 + $0x2a8] sm:$0xff]
    %v1282 = vld [vmem:[#allocation3 + $0x3a8] sm:$0xff]
    %v1283 = vld [vmem:[#allocation3 + $0x4a8] sm:$0xff]
    %v1284 = vld [vmem:[#allocation3 + $0x5a8] sm:$0xff]
    %v1285 = vld [vmem:[#allocation3 + $0x6a8] sm:$0xff]
    %v1286 = vld [vmem:[#allocation3 + $0x7a8] sm:$0xff]
    %v1287 = vmul.f32 %v1279, %v767
    %v1288 = vmul.f32 %v1280, %v768
    %v1289 = vmul.f32 %v1281, %v769
    %v1290 = vmul.f32 %v1282, %v770
    %v1291 = vmul.f32 %v1283, %v771
    %v1292 = vmul.f32 %v1284, %v772
    %v1293 = vmul.f32 %v1285, %v773
    %v1294 = vmul.f32 %v1286, %v774
    %1295 = vst [vmem:[#allocation6 + $0xa8] sm:$0xff] %v1287
    %1296 = vst [vmem:[#allocation6 + $0x1a8] sm:$0xff] %v1288
    %1297 = vst [vmem:[#allocation6 + $0x2a8] sm:$0xff] %v1289
    %1298 = vst [vmem:[#allocation6 + $0x3a8] sm:$0xff] %v1290
    %1299 = vst [vmem:[#allocation6 + $0x4a8] sm:$0xff] %v1291
    %1300 = vst [vmem:[#allocation6 + $0x5a8] sm:$0xff] %v1292
    %1301 = vst [vmem:[#allocation6 + $0x6a8] sm:$0xff] %v1293
    %1302 = vst [vmem:[#allocation6 + $0x7a8] sm:$0xff] %v1294
    %v1303 = vld [vmem:[#allocation3 + $0xb0] sm:$0xff]
    %v1304 = vld [vmem:[#allocation3 + $0x1b0] sm:$0xff]
    %v1305 = vld [vmem:[#allocation3 + $0x2b0] sm:$0xff]
    %v1306 = vld [vmem:[#allocation3 + $0x3b0] sm:$0xff]
    %v1307 = vld [vmem:[#allocation3 + $0x4b0] sm:$0xff]
    %v1308 = vld [vmem:[#allocation3 + $0x5b0] sm:$0xff]
    %v1309 = vld [vmem:[#allocation3 + $0x6b0] sm:$0xff]
    %v1310 = vld [vmem:[#allocation3 + $0x7b0] sm:$0xff]
    %v1311 = vmul.f32 %v1303, %v767
    %v1312 = vmul.f32 %v1304, %v768
    %v1313 = vmul.f32 %v1305, %v769
    %v1314 = vmul.f32 %v1306, %v770
    %v1315 = vmul.f32 %v1307, %v771
    %v1316 = vmul.f32 %v1308, %v772
    %v1317 = vmul.f32 %v1309, %v773
    %v1318 = vmul.f32 %v1310, %v774
    %1319 = vst [vmem:[#allocation6 + $0xb0] sm:$0xff] %v1311
    %1320 = vst [vmem:[#allocation6 + $0x1b0] sm:$0xff] %v1312
    %1321 = vst [vmem:[#allocation6 + $0x2b0] sm:$0xff] %v1313
    %1322 = vst [vmem:[#allocation6 + $0x3b0] sm:$0xff] %v1314
    %1323 = vst [vmem:[#allocation6 + $0x4b0] sm:$0xff] %v1315
    %1324 = vst [vmem:[#allocation6 + $0x5b0] sm:$0xff] %v1316
    %1325 = vst [vmem:[#allocation6 + $0x6b0] sm:$0xff] %v1317
    %1326 = vst [vmem:[#allocation6 + $0x7b0] sm:$0xff] %v1318
    %v1327 = vld [vmem:[#allocation3 + $0xb8] sm:$0xff]
    %v1328 = vld [vmem:[#allocation3 + $0x1b8] sm:$0xff]
    %v1329 = vld [vmem:[#allocation3 + $0x2b8] sm:$0xff]
    %v1330 = vld [vmem:[#allocation3 + $0x3b8] sm:$0xff]
    %v1331 = vld [vmem:[#allocation3 + $0x4b8] sm:$0xff]
    %v1332 = vld [vmem:[#allocation3 + $0x5b8] sm:$0xff]
    %v1333 = vld [vmem:[#allocation3 + $0x6b8] sm:$0xff]
    %v1334 = vld [vmem:[#allocation3 + $0x7b8] sm:$0xff]
    %v1335 = vmul.f32 %v1327, %v767
    %v1336 = vmul.f32 %v1328, %v768
    %v1337 = vmul.f32 %v1329, %v769
    %v1338 = vmul.f32 %v1330, %v770
    %v1339 = vmul.f32 %v1331, %v771
    %v1340 = vmul.f32 %v1332, %v772
    %v1341 = vmul.f32 %v1333, %v773
    %v1342 = vmul.f32 %v1334, %v774
    %1343 = vst [vmem:[#allocation6 + $0xb8] sm:$0xff] %v1335
    %1344 = vst [vmem:[#allocation6 + $0x1b8] sm:$0xff] %v1336
    %1345 = vst [vmem:[#allocation6 + $0x2b8] sm:$0xff] %v1337
    %1346 = vst [vmem:[#allocation6 + $0x3b8] sm:$0xff] %v1338
    %1347 = vst [vmem:[#allocation6 + $0x4b8] sm:$0xff] %v1339
    %1348 = vst [vmem:[#allocation6 + $0x5b8] sm:$0xff] %v1340
    %1349 = vst [vmem:[#allocation6 + $0x6b8] sm:$0xff] %v1341
    %1350 = vst [vmem:[#allocation6 + $0x7b8] sm:$0xff] %v1342
    %v1351 = vld [vmem:[#allocation3 + $0xc0] sm:$0xff]
    %v1352 = vld [vmem:[#allocation3 + $0x1c0] sm:$0xff]
    %v1353 = vld [vmem:[#allocation3 + $0x2c0] sm:$0xff]
    %v1354 = vld [vmem:[#allocation3 + $0x3c0] sm:$0xff]
    %v1355 = vld [vmem:[#allocation3 + $0x4c0] sm:$0xff]
    %v1356 = vld [vmem:[#allocation3 + $0x5c0] sm:$0xff]
    %v1357 = vld [vmem:[#allocation3 + $0x6c0] sm:$0xff]
    %v1358 = vld [vmem:[#allocation3 + $0x7c0] sm:$0xff]
    %v1359 = vmul.f32 %v1351, %v767
    %v1360 = vmul.f32 %v1352, %v768
    %v1361 = vmul.f32 %v1353, %v769
    %v1362 = vmul.f32 %v1354, %v770
    %v1363 = vmul.f32 %v1355, %v771
    %v1364 = vmul.f32 %v1356, %v772
    %v1365 = vmul.f32 %v1357, %v773
    %v1366 = vmul.f32 %v1358, %v774
    %1367 = vst [vmem:[#allocation6 + $0xc0] sm:$0xff] %v1359
    %1368 = vst [vmem:[#allocation6 + $0x1c0] sm:$0xff] %v1360
    %1369 = vst [vmem:[#allocation6 + $0x2c0] sm:$0xff] %v1361
    %1370 = vst [vmem:[#allocation6 + $0x3c0] sm:$0xff] %v1362
    %1371 = vst [vmem:[#allocation6 + $0x4c0] sm:$0xff] %v1363
    %1372 = vst [vmem:[#allocation6 + $0x5c0] sm:$0xff] %v1364
    %1373 = vst [vmem:[#allocation6 + $0x6c0] sm:$0xff] %v1365
    %1374 = vst [vmem:[#allocation6 + $0x7c0] sm:$0xff] %v1366
    %v1375 = vld [vmem:[#allocation3 + $0xc8] sm:$0xff]
    %v1376 = vld [vmem:[#allocation3 + $0x1c8] sm:$0xff]
    %v1377 = vld [vmem:[#allocation3 + $0x2c8] sm:$0xff]
    %v1378 = vld [vmem:[#allocation3 + $0x3c8] sm:$0xff]
    %v1379 = vld [vmem:[#allocation3 + $0x4c8] sm:$0xff]
    %v1380 = vld [vmem:[#allocation3 + $0x5c8] sm:$0xff]
    %v1381 = vld [vmem:[#allocation3 + $0x6c8] sm:$0xff]
    %v1382 = vld [vmem:[#allocation3 + $0x7c8] sm:$0xff]
    %v1383 = vmul.f32 %v1375, %v767
    %v1384 = vmul.f32 %v1376, %v768
    %v1385 = vmul.f32 %v1377, %v769
    %v1386 = vmul.f32 %v1378, %v770
    %v1387 = vmul.f32 %v1379, %v771
    %v1388 = vmul.f32 %v1380, %v772
    %v1389 = vmul.f32 %v1381, %v773
    %v1390 = vmul.f32 %v1382, %v774
    %1391 = vst [vmem:[#allocation6 + $0xc8] sm:$0xff] %v1383
    %1392 = vst [vmem:[#allocation6 + $0x1c8] sm:$0xff] %v1384
    %1393 = vst [vmem:[#allocation6 + $0x2c8] sm:$0xff] %v1385
    %1394 = vst [vmem:[#allocation6 + $0x3c8] sm:$0xff] %v1386
    %1395 = vst [vmem:[#allocation6 + $0x4c8] sm:$0xff] %v1387
    %1396 = vst [vmem:[#allocation6 + $0x5c8] sm:$0xff] %v1388
    %1397 = vst [vmem:[#allocation6 + $0x6c8] sm:$0xff] %v1389
    %1398 = vst [vmem:[#allocation6 + $0x7c8] sm:$0xff] %v1390
    %v1399 = vld [vmem:[#allocation3 + $0xd0] sm:$0xff]
    %v1400 = vld [vmem:[#allocation3 + $0x1d0] sm:$0xff]
    %v1401 = vld [vmem:[#allocation3 + $0x2d0] sm:$0xff]
    %v1402 = vld [vmem:[#allocation3 + $0x3d0] sm:$0xff]
    %v1403 = vld [vmem:[#allocation3 + $0x4d0] sm:$0xff]
    %v1404 = vld [vmem:[#allocation3 + $0x5d0] sm:$0xff]
    %v1405 = vld [vmem:[#allocation3 + $0x6d0] sm:$0xff]
    %v1406 = vld [vmem:[#allocation3 + $0x7d0] sm:$0xff]
    %v1407 = vmul.f32 %v1399, %v767
    %v1408 = vmul.f32 %v1400, %v768
    %v1409 = vmul.f32 %v1401, %v769
    %v1410 = vmul.f32 %v1402, %v770
    %v1411 = vmul.f32 %v1403, %v771
    %v1412 = vmul.f32 %v1404, %v772
    %v1413 = vmul.f32 %v1405, %v773
    %v1414 = vmul.f32 %v1406, %v774
    %1415 = vst [vmem:[#allocation6 + $0xd0] sm:$0xff] %v1407
    %1416 = vst [vmem:[#allocation6 + $0x1d0] sm:$0xff] %v1408
    %1417 = vst [vmem:[#allocation6 + $0x2d0] sm:$0xff] %v1409
    %1418 = vst [vmem:[#allocation6 + $0x3d0] sm:$0xff] %v1410
    %1419 = vst [vmem:[#allocation6 + $0x4d0] sm:$0xff] %v1411
    %1420 = vst [vmem:[#allocation6 + $0x5d0] sm:$0xff] %v1412
    %1421 = vst [vmem:[#allocation6 + $0x6d0] sm:$0xff] %v1413
    %1422 = vst [vmem:[#allocation6 + $0x7d0] sm:$0xff] %v1414
    %v1423 = vld [vmem:[#allocation3 + $0xd8] sm:$0xff]
    %v1424 = vld [vmem:[#allocation3 + $0x1d8] sm:$0xff]
    %v1425 = vld [vmem:[#allocation3 + $0x2d8] sm:$0xff]
    %v1426 = vld [vmem:[#allocation3 + $0x3d8] sm:$0xff]
    %v1427 = vld [vmem:[#allocation3 + $0x4d8] sm:$0xff]
    %v1428 = vld [vmem:[#allocation3 + $0x5d8] sm:$0xff]
    %v1429 = vld [vmem:[#allocation3 + $0x6d8] sm:$0xff]
    %v1430 = vld [vmem:[#allocation3 + $0x7d8] sm:$0xff]
    %v1431 = vmul.f32 %v1423, %v767
    %v1432 = vmul.f32 %v1424, %v768
    %v1433 = vmul.f32 %v1425, %v769
    %v1434 = vmul.f32 %v1426, %v770
    %v1435 = vmul.f32 %v1427, %v771
    %v1436 = vmul.f32 %v1428, %v772
    %v1437 = vmul.f32 %v1429, %v773
    %v1438 = vmul.f32 %v1430, %v774
    %1439 = vst [vmem:[#allocation6 + $0xd8] sm:$0xff] %v1431
    %1440 = vst [vmem:[#allocation6 + $0x1d8] sm:$0xff] %v1432
    %1441 = vst [vmem:[#allocation6 + $0x2d8] sm:$0xff] %v1433
    %1442 = vst [vmem:[#allocation6 + $0x3d8] sm:$0xff] %v1434
    %1443 = vst [vmem:[#allocation6 + $0x4d8] sm:$0xff] %v1435
    %1444 = vst [vmem:[#allocation6 + $0x5d8] sm:$0xff] %v1436
    %1445 = vst [vmem:[#allocation6 + $0x6d8] sm:$0xff] %v1437
    %1446 = vst [vmem:[#allocation6 + $0x7d8] sm:$0xff] %v1438
    %v1447 = vld [vmem:[#allocation3 + $0xe0] sm:$0xff]
    %v1448 = vld [vmem:[#allocation3 + $0x1e0] sm:$0xff]
    %v1449 = vld [vmem:[#allocation3 + $0x2e0] sm:$0xff]
    %v1450 = vld [vmem:[#allocation3 + $0x3e0] sm:$0xff]
    %v1451 = vld [vmem:[#allocation3 + $0x4e0] sm:$0xff]
    %v1452 = vld [vmem:[#allocation3 + $0x5e0] sm:$0xff]
    %v1453 = vld [vmem:[#allocation3 + $0x6e0] sm:$0xff]
    %v1454 = vld [vmem:[#allocation3 + $0x7e0] sm:$0xff]
    %v1455 = vmul.f32 %v1447, %v767
    %v1456 = vmul.f32 %v1448, %v768
    %v1457 = vmul.f32 %v1449, %v769
    %v1458 = vmul.f32 %v1450, %v770
    %v1459 = vmul.f32 %v1451, %v771
    %v1460 = vmul.f32 %v1452, %v772
    %v1461 = vmul.f32 %v1453, %v773
    %v1462 = vmul.f32 %v1454, %v774
    %1463 = vst [vmem:[#allocation6 + $0xe0] sm:$0xff] %v1455
    %1464 = vst [vmem:[#allocation6 + $0x1e0] sm:$0xff] %v1456
    %1465 = vst [vmem:[#allocation6 + $0x2e0] sm:$0xff] %v1457
    %1466 = vst [vmem:[#allocation6 + $0x3e0] sm:$0xff] %v1458
    %1467 = vst [vmem:[#allocation6 + $0x4e0] sm:$0xff] %v1459
    %1468 = vst [vmem:[#allocation6 + $0x5e0] sm:$0xff] %v1460
    %1469 = vst [vmem:[#allocation6 + $0x6e0] sm:$0xff] %v1461
    %1470 = vst [vmem:[#allocation6 + $0x7e0] sm:$0xff] %v1462
    %v1471 = vld [vmem:[#allocation3 + $0xe8] sm:$0xff]
    %v1472 = vld [vmem:[#allocation3 + $0x1e8] sm:$0xff]
    %v1473 = vld [vmem:[#allocation3 + $0x2e8] sm:$0xff]
    %v1474 = vld [vmem:[#allocation3 + $0x3e8] sm:$0xff]
    %v1475 = vld [vmem:[#allocation3 + $0x4e8] sm:$0xff]
    %v1476 = vld [vmem:[#allocation3 + $0x5e8] sm:$0xff]
    %v1477 = vld [vmem:[#allocation3 + $0x6e8] sm:$0xff]
    %v1478 = vld [vmem:[#allocation3 + $0x7e8] sm:$0xff]
    %v1479 = vmul.f32 %v1471, %v767
    %v1480 = vmul.f32 %v1472, %v768
    %v1481 = vmul.f32 %v1473, %v769
    %v1482 = vmul.f32 %v1474, %v770
    %v1483 = vmul.f32 %v1475, %v771
    %v1484 = vmul.f32 %v1476, %v772
    %v1485 = vmul.f32 %v1477, %v773
    %v1486 = vmul.f32 %v1478, %v774
    %1487 = vst [vmem:[#allocation6 + $0xe8] sm:$0xff] %v1479
    %1488 = vst [vmem:[#allocation6 + $0x1e8] sm:$0xff] %v1480
    %1489 = vst [vmem:[#allocation6 + $0x2e8] sm:$0xff] %v1481
    %1490 = vst [vmem:[#allocation6 + $0x3e8] sm:$0xff] %v1482
    %1491 = vst [vmem:[#allocation6 + $0x4e8] sm:$0xff] %v1483
    %1492 = vst [vmem:[#allocation6 + $0x5e8] sm:$0xff] %v1484
    %1493 = vst [vmem:[#allocation6 + $0x6e8] sm:$0xff] %v1485
    %1494 = vst [vmem:[#allocation6 + $0x7e8] sm:$0xff] %v1486
    %v1495 = vld [vmem:[#allocation3 + $0xf0] sm:$0xff]
    %v1496 = vld [vmem:[#allocation3 + $0x1f0] sm:$0xff]
    %v1497 = vld [vmem:[#allocation3 + $0x2f0] sm:$0xff]
    %v1498 = vld [vmem:[#allocation3 + $0x3f0] sm:$0xff]
    %v1499 = vld [vmem:[#allocation3 + $0x4f0] sm:$0xff]
    %v1500 = vld [vmem:[#allocation3 + $0x5f0] sm:$0xff]
    %v1501 = vld [vmem:[#allocation3 + $0x6f0] sm:$0xff]
    %v1502 = vld [vmem:[#allocation3 + $0x7f0] sm:$0xff]
    %v1503 = vmul.f32 %v1495, %v767
    %v1504 = vmul.f32 %v1496, %v768
    %v1505 = vmul.f32 %v1497, %v769
    %v1506 = vmul.f32 %v1498, %v770
    %v1507 = vmul.f32 %v1499, %v771
    %v1508 = vmul.f32 %v1500, %v772
    %v1509 = vmul.f32 %v1501, %v773
    %v1510 = vmul.f32 %v1502, %v774
    %1511 = vst [vmem:[#allocation6 + $0xf0] sm:$0xff] %v1503
    %1512 = vst [vmem:[#allocation6 + $0x1f0] sm:$0xff] %v1504
    %1513 = vst [vmem:[#allocation6 + $0x2f0] sm:$0xff] %v1505
    %1514 = vst [vmem:[#allocation6 + $0x3f0] sm:$0xff] %v1506
    %1515 = vst [vmem:[#allocation6 + $0x4f0] sm:$0xff] %v1507
    %1516 = vst [vmem:[#allocation6 + $0x5f0] sm:$0xff] %v1508
    %1517 = vst [vmem:[#allocation6 + $0x6f0] sm:$0xff] %v1509
    %1518 = vst [vmem:[#allocation6 + $0x7f0] sm:$0xff] %v1510
    %v1519 = vld [vmem:[#allocation3 + $0xf8] sm:$0xff]
    %v1520 = vld [vmem:[#allocation3 + $0x1f8] sm:$0xff]
    %v1521 = vld [vmem:[#allocation3 + $0x2f8] sm:$0xff]
    %v1522 = vld [vmem:[#allocation3 + $0x3f8] sm:$0xff]
    %v1523 = vld [vmem:[#allocation3 + $0x4f8] sm:$0xff]
    %v1524 = vld [vmem:[#allocation3 + $0x5f8] sm:$0xff]
    %v1525 = vld [vmem:[#allocation3 + $0x6f8] sm:$0xff]
    %v1526 = vld [vmem:[#allocation3 + $0x7f8] sm:$0xff]
    %v1527 = vmul.f32 %v1519, %v767
    %v1528 = vmul.f32 %v1520, %v768
    %v1529 = vmul.f32 %v1521, %v769
    %v1530 = vmul.f32 %v1522, %v770
    %v1531 = vmul.f32 %v1523, %v771
    %v1532 = vmul.f32 %v1524, %v772
    %v1533 = vmul.f32 %v1525, %v773
    %v1534 = vmul.f32 %v1526, %v774
    %1535 = vst [vmem:[#allocation6 + $0xf8] sm:$0xff] %v1527
    %1536 = vst [vmem:[#allocation6 + $0x1f8] sm:$0xff] %v1528
    %1537 = vst [vmem:[#allocation6 + $0x2f8] sm:$0xff] %v1529
    %1538 = vst [vmem:[#allocation6 + $0x3f8] sm:$0xff] %v1530
    %1539 = vst [vmem:[#allocation6 + $0x4f8] sm:$0xff] %v1531
    %1540 = vst [vmem:[#allocation6 + $0x5f8] sm:$0xff] %v1532
    %1541 = vst [vmem:[#allocation6 + $0x6f8] sm:$0xff] %v1533
    %1542 = vst [vmem:[#allocation6 + $0x7f8] sm:$0xff] %v1534
    // Predicated region
    $region26: #{tpu_custom_call.1} parent=1 // pred_check
      _
    $region27: #{tpu_custom_call.1} parent=1 // pred_check_branch
      %1544 = sbr.rel (0) target = $region29
    $region28: #{tpu_custom_call.1} parent=1 // pred_region
      %s1546 = ssub.s32 32768, 32768
      %1547 = vsyncadd [#allocation5], %s1546
      %s1548 = sshll.u32 [#allocation6], 4
      %s1549 = int_to_ptr.vmem [resolvable:$true] %s1548
      %1554 = dma.vmem_to_hbm [thread:$0]  %s1549, 32768, %s5, [#allocation5], 4096, 4096, 256
    $region29: #{tpu_custom_call.1} parent=1 // pred_fallthru
      _
    // Predicated region
    $region30: #{tpu_custom_call.1} parent=1 // pred_check
      _
    $region31: #{tpu_custom_call.1} parent=1 // pred_check_branch
      %1556 = sbr.rel (0) target = $region33
    $region32: #{tpu_custom_call.1} parent=1 // pred_region
      %1557 = dma.done [#allocation5], 32768
    $region33: #{tpu_custom_call.1} parent=1 // pred_fallthru
      _
    %1558 = vsyncpa [#allocation4], 1
    %1559 = vsyncpa [#allocation5], 1

</llo_original>
